<compile_context>
chip_gen: v6e
topology: v6e:2x2x1
jax: 0.10.0
libtpu: 0.0.40
codegen_flags: <defaults>
</compile_context>

<pallas_src>
import functools

import jax
import jax.numpy as jnp
from jax.experimental import pallas as pl
from jax.experimental.pallas import tpu as pltpu


# ------------------------- packed parameter layout ---------------------------


def _align8(n):
    return ((n + 7) // 8) * 8


def _ceil128(n):
    return ((n + 127) // 128) * 128


def _layout(dims):
    """Row offsets of every sub-block inside the single packed param slab."""
    L, D, A, H = dims
    lay = {"width": 3 * H}   # slab width = layer-1 fused output [g | logv | prior]
    o = 0

    def put(name, rows):
        nonlocal o
        lay[name] = o
        o += _align8(rows)

    # fused encoder + prior
    put("ew1", D + A)      # rows: [x | u];  cols: [gW1 | vW1 | lW1(u only)]
    put("eb1", 1)          # cols: [gb1 | vb1 | lb1]
    put("ew2", 3 * H)      # 3-block block-diag: gW2 / vW2 / lW2(->L cols)
    put("eb2", 1)          # cols: [gb2 | vb2 | lb2]
    put("ew3", 2 * H)      # block-diag: gW3 / vW3 -> [mean | logvar]
    put("eb3", 1)          # cols: [gb3 | vb3]
    # decoder
    put("fw1", L)
    put("fb1", 1)
    put("fw2", H)
    put("fb2", 1)
    put("fw3", H)
    put("fb3", 1)
    lay["rows"] = o
    return lay


def pack_params(raw, dims):
    """Pack all 24 raw (in,out)-layout weights/biases into ONE f32 slab."""
    L, D, A, H = dims
    (lw1, lb1, lw2, lb2,
     gw1x, gw1u, gb1, gw2, gb2, gw3, gb3,
     vw1x, vw1u, vb1, vw2, vb2, vw3, vb3,
     fw1, fb1, fw2, fb2, fw3, fb3) = raw
    lay = _layout(dims)
    W = lay["width"]
    w = jnp.zeros((lay["rows"], W), jnp.float32)

    # fused layer 1: rows [x | u], cols [g | logv | prior]
    e1 = lay["ew1"]
    w = w.at[e1:e1 + D, 0:H].set(gw1x)
    w = w.at[e1:e1 + D, H:2 * H].set(vw1x)
    w = w.at[e1 + D:e1 + D + A, 0:H].set(gw1u)
    w = w.at[e1 + D:e1 + D + A, H:2 * H].set(vw1u)
    w = w.at[e1 + D:e1 + D + A, 2 * H:3 * H].set(lw1)   # prior uses u only
    w = w.at[lay["eb1"]:lay["eb1"] + 1, 0:H].set(gb1)
    w = w.at[lay["eb1"]:lay["eb1"] + 1, H:2 * H].set(vb1)
    w = w.at[lay["eb1"]:lay["eb1"] + 1, 2 * H:3 * H].set(lb1)

    # fused layer 2: block-diag g / v, plus prior output columns [2H:2H+L]
    e2 = lay["ew2"]
    w = w.at[e2:e2 + H, 0:H].set(gw2)
    w = w.at[e2 + H:e2 + 2 * H, H:2 * H].set(vw2)
    w = w.at[e2 + 2 * H:e2 + 3 * H, 2 * H:2 * H + L].set(lw2)
    w = w.at[lay["eb2"]:lay["eb2"] + 1, 0:H].set(gb2)
    w = w.at[lay["eb2"]:lay["eb2"] + 1, H:2 * H].set(vb2)
    w = w.at[lay["eb2"]:lay["eb2"] + 1, 2 * H:2 * H + L].set(lb2)

    # fused layer 3: block-diag g / v -> [mean | logvar]
    e3 = lay["ew3"]
    w = w.at[e3:e3 + H, 0:L].set(gw3)
    w = w.at[e3 + H:e3 + 2 * H, L:2 * L].set(vw3)
    w = w.at[lay["eb3"]:lay["eb3"] + 1, 0:L].set(gb3)
    w = w.at[lay["eb3"]:lay["eb3"] + 1, L:2 * L].set(vb3)

    # decoder
    w = w.at[lay["fw1"]:lay["fw1"] + L, 0:H].set(fw1)
    w = w.at[lay["fb1"]:lay["fb1"] + 1, 0:H].set(fb1)
    w = w.at[lay["fw2"]:lay["fw2"] + H, 0:H].set(fw2)
    w = w.at[lay["fb2"]:lay["fb2"] + 1, 0:H].set(fb2)
    w = w.at[lay["fw3"]:lay["fw3"] + H, 0:D].set(fw3)
    w = w.at[lay["fb3"]:lay["fb3"] + 1, 0:D].set(fb3)
    return w


# ------------------------------ Pallas kernel ---------------------------------


def _ivae_kernel(xue_ref, w_ref, out_ref, *, L, D, A, H, lay, out_width,
                 mxu_dtype):
    f32 = jnp.float32
    xue = xue_ref[...]                 # (tb, in_width) lane-dense input slab
    xu = xue[:, 0:D + A]               # cat([x, u], dim=1)
    eps = xue[:, D + A:D + A + L]
    tb = xue.shape[0]

    def ld(off, rows, cols=None):
        blk = w_ref[off:off + rows, :] if cols is None \
            else w_ref[off:off + rows, 0:cols]
        return blk.astype(mxu_dtype)

    def dot(a, b):
        return jnp.dot(a.astype(mxu_dtype), b, preferred_element_type=f32)

    def relu(a):
        return jnp.maximum(a, 0.0)

    # layer 1 (fused [g | logv | prior]): (tb, D+A) @ (D+A, 3H)
    h1 = relu(dot(xu, ld(lay["ew1"], D + A))
              + w_ref[lay["eb1"]:lay["eb1"] + 1, :])

    # layer 2 (block-diag g/v + prior output): (tb, 3H) @ (3H, 2H+L)
    r2 = (dot(h1, ld(lay["ew2"], 3 * H, 2 * H + L))
          + w_ref[lay["eb2"]:lay["eb2"] + 1, 0:2 * H + L])
    prior_var = jnp.exp(r2[:, 2 * H:2 * H + L])     # logl has no final ReLU
    h2 = relu(r2[:, 0:2 * H])

    # layer 3 (block-diag g/v): (tb, 2H) @ (2H, 2L) -> [mean_z | log_var]
    ml = (dot(h2, ld(lay["ew3"], 2 * H, 2 * L))
          + w_ref[lay["eb3"]:lay["eb3"] + 1, 0:2 * L])
    mean_z = ml[:, 0:L]
    log_var = ml[:, L:2 * L]

    # reparameterize: std straight from log_var (single EUP transcendental)
    std = jnp.exp(0.5 * log_var)
    var_z = std * std
    z = std * eps + mean_z

    # decoder: recon_x = f(z)
    h = relu(dot(z, ld(lay["fw1"], L, H)) + w_ref[lay["fb1"]:lay["fb1"] + 1, 0:H])
    h = relu(dot(h, ld(lay["fw2"], H, H)) + w_ref[lay["fb2"]:lay["fb2"] + 1, 0:H])
    recon = dot(h, ld(lay["fw3"], H, D)) + w_ref[lay["fb3"]:lay["fb3"] + 1, 0:D]

    # ONE lane-dense, unmasked full-width store:
    # [mean_z | var_z | recon_x | z | prior_var | zero pad]
    parts = [mean_z, var_z, recon, z, prior_var]
    pad = out_width - (4 * L + D)
    if pad > 0:
        parts.append(jnp.zeros((tb, pad), f32))
    out_ref[...] = jnp.concatenate(parts, axis=1)


# --------------------------------- wrapper ------------------------------------


def ivae_forward_pallas(x, u, eps, w_slab, dims, *, batch_block=None,
                        mxu_dtype=jnp.bfloat16):
    """Returns (mean_z, var_z, recon_x, sampled_z, prior_mean, prior_var)."""
    L, D, A, H = dims
    n = x.shape[0]
    lay = _layout(dims)

    # Pack the three per-row inputs into one lane-padded slab: 1 DMA stream.
    in_used = D + A + L
    in_width = _ceil128(in_used)
    xue = jnp.concatenate([x, u, eps], axis=1)
    if in_width > in_used:
        xue = jnp.pad(xue, ((0, 0), (0, in_width - in_used)))

    out_used = 4 * L + D
    out_width = _ceil128(out_used)

    # Batch tile: default = whole batch (single grid step).  When tiling,
    # use large tiles (>= 256 rows) so per-step pipeline overhead amortizes.
    if batch_block is None or batch_block >= n:
        tb = n
    else:
        tb = batch_block
    assert n % tb == 0 and tb % 8 == 0, "batch tile must divide n, mult of 8"
    grid = (n // tb,)

    # VMEM budget: double-buffered batch tiles + resident weight slab
    # (+ headroom).  Capped at 48 MiB so it also fits v7x's 64 MiB VMEM.
    slab_bytes = int(w_slab.size) * 4
    need = 2 * tb * (in_width + out_width) * 4 + slab_bytes + (2 << 20)
    vmem_limit = int(min(48 << 20, max(16 << 20, need)))

    kern = functools.partial(_ivae_kernel, L=L, D=D, A=A, H=H, lay=lay,
                             out_width=out_width, mxu_dtype=mxu_dtype)

    bmap = lambda i: (i, 0)   # batch-blocked arrays
    wmap = lambda i: (0, 0)   # weight slab: VMEM-resident across grid steps

    slab = pl.pallas_call(
        kern,
        out_shape=jax.ShapeDtypeStruct((n, out_width), jnp.float32),
        grid=grid,
        in_specs=[
            pl.BlockSpec((tb, in_width), bmap),
            pl.BlockSpec(w_slab.shape, wmap),
        ],
        out_specs=pl.BlockSpec((tb, out_width), bmap),
        compiler_params=pltpu.CompilerParams(
            dimension_semantics=("parallel",),
            vmem_limit_bytes=vmem_limit),
    )(xue, w_slab)

    mean_z = slab[:, 0:L]
    var_z = slab[:, L:2 * L]
    recon_x = slab[:, 2 * L:2 * L + D]
    sampled_z = slab[:, 2 * L + D:3 * L + D]
    prior_var = slab[:, 3 * L + D:4 * L + D]
    prior_mean = jnp.zeros((1,), jnp.float32)   # self.prior_mean
    return mean_z, var_z, recon_x, sampled_z, prior_mean, prior_var


# ----------------------------- parameter init ----------------------------------


def _xavier_uniform(key, fan_in, fan_out):
    limit = jnp.sqrt(6.0 / (fan_in + fan_out))
    return jax.random.uniform(
        key, (fan_in, fan_out), jnp.float32, minval=-limit, maxval=limit)


def _bias(key, fan_in, fan_out):
    # PyTorch Linear default bias init: U(-1/sqrt(fan_in), 1/sqrt(fan_in)).
    bound = 1.0 / jnp.sqrt(jnp.float32(fan_in))
    return jax.random.uniform(
        key, (1, fan_out), jnp.float32, minval=-bound, maxval=bound)


def make_params(key, latent_dim, data_dim, aux_dim, hidden_dim):
    keys = jax.random.split(key, 32)
    k = iter(range(32))

    # logl: aux -> hidden -> latent
    lw1 = _xavier_uniform(keys[next(k)], aux_dim, hidden_dim)
    lb1 = _bias(keys[next(k)], aux_dim, hidden_dim)
    lw2 = _xavier_uniform(keys[next(k)], hidden_dim, latent_dim)
    lb2 = _bias(keys[next(k)], hidden_dim, latent_dim)

    # g: (data+aux) -> hidden -> hidden -> latent ; W1 split into x/u parts
    gw1x = _xavier_uniform(keys[next(k)], data_dim, hidden_dim)
    gw1u = _xavier_uniform(keys[next(k)], aux_dim, hidden_dim)
    gb1 = _bias(keys[next(k)], data_dim + aux_dim, hidden_dim)
    gw2 = _xavier_uniform(keys[next(k)], hidden_dim, hidden_dim)
    gb2 = _bias(keys[next(k)], hidden_dim, hidden_dim)
    gw3 = _xavier_uniform(keys[next(k)], hidden_dim, latent_dim)
    gb3 = _bias(keys[next(k)], hidden_dim, latent_dim)

    # logv: same architecture as g
    vw1x = _xavier_uniform(keys[next(k)], data_dim, hidden_dim)
    vw1u = _xavier_uniform(keys[next(k)], aux_dim, hidden_dim)
    vb1 = _bias(keys[next(k)], data_dim + aux_dim, hidden_dim)
    vw2 = _xavier_uniform(keys[next(k)], hidden_dim, hidden_dim)
    vb2 = _bias(keys[next(k)], hidden_dim, hidden_dim)
    vw3 = _xavier_uniform(keys[next(k)], hidden_dim, latent_dim)
    vb3 = _bias(keys[next(k)], hidden_dim, latent_dim)

    # f: latent -> hidden -> hidden -> data
    fw1 = _xavier_uniform(keys[next(k)], latent_dim, hidden_dim)
    fb1 = _bias(keys[next(k)], latent_dim, hidden_dim)
    fw2 = _xavier_uniform(keys[next(k)], hidden_dim, hidden_dim)
    fb2 = _bias(keys[next(k)], hidden_dim, hidden_dim)
    fw3 = _xavier_uniform(keys[next(k)], hidden_dim, data_dim)
    fb3 = _bias(keys[next(k)], hidden_dim, data_dim)

    return (lw1, lb1, lw2, lb2,
            gw1x, gw1u, gb1, gw2, gb2, gw3, gb3,
            vw1x, vw1u, vb1, vw2, vb2, vw3, vb3,
            fw1, fb1, fw2, fb2, fw3, fb3)


# ----------------------- pure-JAX reference (correctness) ----------------------


def ivae_forward_ref(x, u, eps, params, mxu_dtype=None):
    (lw1, lb1, lw2, lb2,
     gw1x, gw1u, gb1, gw2, gb2, gw3, gb3,
     vw1x, vw1u, vb1, vw2, vb2, vw3, vb3,
     fw1, fb1, fw2, fb2, fw3, fb3) = params

    def mm(a, w):
        if mxu_dtype is not None:
            a = a.astype(mxu_dtype)
            w = w.astype(mxu_dtype)
        return jnp.dot(a, w, preferred_element_type=jnp.float32)

    relu = lambda a: jnp.maximum(a, 0.0)

    h = relu(mm(u, lw1) + lb1)
    prior_var = jnp.exp(mm(h, lw2) + lb2)

    cat = jnp.concatenate([x, u], axis=1)
    gw1 = jnp.concatenate([gw1x, gw1u], axis=0)
    vw1 = jnp.concatenate([vw1x, vw1u], axis=0)

    h = relu(mm(cat, gw1) + gb1)
    h = relu(mm(h, gw2) + gb2)
    mean_z = mm(h, gw3) + gb3

    h = relu(mm(cat, vw1) + vb1)
    h = relu(mm(h, vw2) + vb2)
    var_z = jnp.exp(mm(h, vw3) + vb3)

    z = jnp.sqrt(var_z) * eps + mean_z

    h = relu(mm(z, fw1) + fb1)
    h = relu(mm(h, fw2) + fb2)
    recon_x = mm(h, fw3) + fb3

    prior_mean = jnp.zeros((1,), jnp.float32)
    return mean_z, var_z, recon_x, z, prior_mean, prior_var


# ------------------------------------ main -------------------------------------


if __name__ == "__main__":
    latent_dim = 4
    data_dim = 16
    aux_dim = 8
    hidden_dim = 32
    batch = 512
    batch_block = 256   # large tiles (>=256 rows); 2 grid steps shard across v7x TCs

    dims = (latent_dim, data_dim, aux_dim, hidden_dim)

    key = jax.random.PRNGKey(0)
    k_param, k_x, k_u, k_eps = jax.random.split(key, 4)

    raw_params = make_params(k_param, *dims)
    w_slab = pack_params(raw_params, dims)   # done once, like weight loading

    x = jax.random.normal(k_x, (batch, data_dim), jnp.float32)
    u = jax.random.normal(k_u, (batch, aux_dim), jnp.float32)
    # torch.randn() in forward() -> reparameterization noise passed in explicitly.
    eps = jax.random.normal(k_eps, (batch, latent_dim), jnp.float32)

    # bf16-MXU kernel (recommended config) vs. a reference with matching casts.
    fwd_bf16 = jax.jit(lambda x, u, eps, w: ivae_forward_pallas(
        x, u, eps, w, dims, batch_block=batch_block, mxu_dtype=jnp.bfloat16))
    out = jax.block_until_ready(fwd_bf16(x, u, eps, w_slab))
    ref = ivae_forward_ref(x, u, eps, raw_params, mxu_dtype=jnp.bfloat16)
    for o, r in zip(out, ref):
        assert o.shape == r.shape and o.dtype == r.dtype
        assert jnp.allclose(o, r, atol=1e-2, rtol=1e-2)

    # f32-MXU kernel (single grid step) vs. f32 reference: checks the fused /
    # packed formulation itself (zero-padded K blocks are numerically exact).
    fwd_f32 = jax.jit(lambda x, u, eps, w: ivae_forward_pallas(
        x, u, eps, w, dims, batch_block=None, mxu_dtype=jnp.float32))
    out32 = jax.block_until_ready(fwd_f32(x, u, eps, w_slab))
    ref32 = ivae_forward_ref(x, u, eps, raw_params, mxu_dtype=None)
    for o, r in zip(out32, ref32):
        assert o.shape == r.shape and o.dtype == r.dtype
        assert jnp.allclose(o, r, atol=1e-4, rtol=1e-4)

    print("KERNEL_OK")
</pallas_src>

<mosaic_0001>
module attributes {stable_mosaic.version = 11 : i64} {
  func.func @_ivae_kernel(%arg0: i32, %arg1: memref<256x128xf32, #tpu.memory_space<vmem>>, %arg2: memref<304x96xf32, #tpu.memory_space<vmem>>, %arg3: memref<256x128xf32, #tpu.memory_space<vmem>>) attributes {dimension_semantics = [#tpu.dimension_semantics<parallel>], iteration_bounds = array<i64: 2>, scalar_prefetch = 0 : i64, scratch_operands = 0 : i64, tpu.core_type = #tpu.core_type<tc>, window_params = [{transform_indices = @transform_0, window_bounds = array<i64: 256, 128>}, {pipeline_mode = #tpu.pipeline_mode<synchronous>, transform_indices = @transform_1, window_bounds = array<i64: 304, 96>}, {transform_indices = @transform_2, window_bounds = array<i64: 256, 128>}]} {
    %c0 = arith.constant 0 : index
    %c0_0 = arith.constant 0 : index
    %0 = vector.load %arg1[%c0, %c0_0] : memref<256x128xf32, #tpu.memory_space<vmem>>, vector<256x128xf32>
    %1 = vector.extract_strided_slice %0 {offsets = [0, 0], sizes = [256, 24], strides = [1, 1]} : vector<256x128xf32> to vector<256x24xf32>
    %2 = vector.extract_strided_slice %0 {offsets = [0, 24], sizes = [256, 4], strides = [1, 1]} : vector<256x128xf32> to vector<256x4xf32>
    %c0_1 = arith.constant 0 : index
    %c0_2 = arith.constant 0 : index
    %3 = vector.load %arg2[%c0_1, %c0_2] : memref<304x96xf32, #tpu.memory_space<vmem>>, vector<24x96xf32>
    %4 = arith.truncf %3 : vector<24x96xf32> to vector<24x96xbf16>
    %5 = arith.truncf %1 : vector<256x24xf32> to vector<256x24xbf16>
    %cst = arith.constant dense<0.000000e+00> : vector<256x96xf32>
    %6 = tpu.matmul %5, %4, %cst {dimension_numbers = #tpu.dot_dimension_numbers<[1], [0], [0], [1], [0, 0, 1, 1], [], []>} : vector<256x24xbf16>, vector<24x96xbf16>, vector<256x96xf32> -> vector<256x96xf32>
    %c24 = arith.constant 24 : index
    %c0_3 = arith.constant 0 : index
    %7 = vector.load %arg2[%c24, %c0_3] : memref<304x96xf32, #tpu.memory_space<vmem>>, vector<1x96xf32>
    %8 = vector.broadcast %7 : vector<1x96xf32> to vector<256x96xf32>
    %9 = arith.addf %6, %8 : vector<256x96xf32>
    %cst_4 = arith.constant 0.000000e+00 : f32
    %10 = vector.broadcast %cst_4 : f32 to vector<256x96xf32>
    %11 = arith.maximumf %9, %10 : vector<256x96xf32>
    %c32 = arith.constant 32 : index
    %c0_5 = arith.constant 0 : index
    %12 = vector.load %arg2[%c32, %c0_5] : memref<304x96xf32, #tpu.memory_space<vmem>>, vector<96x68xf32>
    %13 = arith.truncf %12 : vector<96x68xf32> to vector<96x68xbf16>
    %14 = arith.truncf %11 : vector<256x96xf32> to vector<256x96xbf16>
    %cst_6 = arith.constant dense<0.000000e+00> : vector<256x68xf32>
    %15 = tpu.matmul %14, %13, %cst_6 {dimension_numbers = #tpu.dot_dimension_numbers<[1], [0], [0], [1], [0, 0, 1, 1], [], []>} : vector<256x96xbf16>, vector<96x68xbf16>, vector<256x68xf32> -> vector<256x68xf32>
    %c128 = arith.constant 128 : index
    %c0_7 = arith.constant 0 : index
    %16 = vector.load %arg2[%c128, %c0_7] : memref<304x96xf32, #tpu.memory_space<vmem>>, vector<1x68xf32>
    %17 = vector.broadcast %16 : vector<1x68xf32> to vector<256x68xf32>
    %18 = arith.addf %15, %17 : vector<256x68xf32>
    %19 = vector.extract_strided_slice %18 {offsets = [0, 64], sizes = [256, 4], strides = [1, 1]} : vector<256x68xf32> to vector<256x4xf32>
    %20 = math.exp %19 : vector<256x4xf32>
    %21 = vector.extract_strided_slice %18 {offsets = [0, 0], sizes = [256, 64], strides = [1, 1]} : vector<256x68xf32> to vector<256x64xf32>
    %cst_8 = arith.constant 0.000000e+00 : f32
    %22 = vector.broadcast %cst_8 : f32 to vector<256x64xf32>
    %23 = arith.maximumf %21, %22 : vector<256x64xf32>
    %c136 = arith.constant 136 : index
    %c0_9 = arith.constant 0 : index
    %24 = vector.load %arg2[%c136, %c0_9] : memref<304x96xf32, #tpu.memory_space<vmem>>, vector<64x8xf32>
    %25 = arith.truncf %24 : vector<64x8xf32> to vector<64x8xbf16>
    %26 = arith.truncf %23 : vector<256x64xf32> to vector<256x64xbf16>
    %cst_10 = arith.constant dense<0.000000e+00> : vector<256x8xf32>
    %27 = tpu.matmul %26, %25, %cst_10 {dimension_numbers = #tpu.dot_dimension_numbers<[1], [0], [0], [1], [0, 0, 1, 1], [], []>} : vector<256x64xbf16>, vector<64x8xbf16>, vector<256x8xf32> -> vector<256x8xf32>
    %c200 = arith.constant 200 : index
    %c0_11 = arith.constant 0 : index
    %28 = vector.load %arg2[%c200, %c0_11] : memref<304x96xf32, #tpu.memory_space<vmem>>, vector<1x8xf32>
    %29 = vector.broadcast %28 : vector<1x8xf32> to vector<256x8xf32>
    %30 = arith.addf %27, %29 : vector<256x8xf32>
    %31 = vector.extract_strided_slice %30 {offsets = [0, 0], sizes = [256, 4], strides = [1, 1]} : vector<256x8xf32> to vector<256x4xf32>
    %32 = vector.extract_strided_slice %30 {offsets = [0, 4], sizes = [256, 4], strides = [1, 1]} : vector<256x8xf32> to vector<256x4xf32>
    %cst_12 = arith.constant 5.000000e-01 : f32
    %33 = vector.broadcast %cst_12 : f32 to vector<256x4xf32>
    %34 = arith.mulf %33, %32 : vector<256x4xf32>
    %35 = math.exp %34 : vector<256x4xf32>
    %36 = arith.mulf %35, %35 : vector<256x4xf32>
    %37 = arith.mulf %35, %2 : vector<256x4xf32>
    %38 = arith.addf %37, %31 : vector<256x4xf32>
    %c208 = arith.constant 208 : index
    %c0_13 = arith.constant 0 : index
    %39 = vector.load %arg2[%c208, %c0_13] : memref<304x96xf32, #tpu.memory_space<vmem>>, vector<4x32xf32>
    %40 = arith.truncf %39 : vector<4x32xf32> to vector<4x32xbf16>
    %41 = arith.truncf %38 : vector<256x4xf32> to vector<256x4xbf16>
    %cst_14 = arith.constant dense<0.000000e+00> : vector<256x32xf32>
    %42 = tpu.matmul %41, %40, %cst_14 {dimension_numbers = #tpu.dot_dimension_numbers<[1], [0], [0], [1], [0, 0, 1, 1], [], []>} : vector<256x4xbf16>, vector<4x32xbf16>, vector<256x32xf32> -> vector<256x32xf32>
    %c216 = arith.constant 216 : index
    %c0_15 = arith.constant 0 : index
    %43 = vector.load %arg2[%c216, %c0_15] : memref<304x96xf32, #tpu.memory_space<vmem>>, vector<1x32xf32>
    %44 = vector.broadcast %43 : vector<1x32xf32> to vector<256x32xf32>
    %45 = arith.addf %42, %44 : vector<256x32xf32>
    %cst_16 = arith.constant 0.000000e+00 : f32
    %46 = vector.broadcast %cst_16 : f32 to vector<256x32xf32>
    %47 = arith.maximumf %45, %46 : vector<256x32xf32>
    %c224 = arith.constant 224 : index
    %c0_17 = arith.constant 0 : index
    %48 = vector.load %arg2[%c224, %c0_17] : memref<304x96xf32, #tpu.memory_space<vmem>>, vector<32x32xf32>
    %49 = arith.truncf %48 : vector<32x32xf32> to vector<32x32xbf16>
    %50 = arith.truncf %47 : vector<256x32xf32> to vector<256x32xbf16>
    %cst_18 = arith.constant dense<0.000000e+00> : vector<256x32xf32>
    %51 = tpu.matmul %50, %49, %cst_18 {dimension_numbers = #tpu.dot_dimension_numbers<[1], [0], [0], [1], [0, 0, 1, 1], [], []>} : vector<256x32xbf16>, vector<32x32xbf16>, vector<256x32xf32> -> vector<256x32xf32>
    %c256 = arith.constant 256 : index
    %c0_19 = arith.constant 0 : index
    %52 = vector.load %arg2[%c256, %c0_19] : memref<304x96xf32, #tpu.memory_space<vmem>>, vector<1x32xf32>
    %53 = vector.broadcast %52 : vector<1x32xf32> to vector<256x32xf32>
    %54 = arith.addf %51, %53 : vector<256x32xf32>
    %cst_20 = arith.constant 0.000000e+00 : f32
    %55 = vector.broadcast %cst_20 : f32 to vector<256x32xf32>
    %56 = arith.maximumf %54, %55 : vector<256x32xf32>
    %c264 = arith.constant 264 : index
    %c0_21 = arith.constant 0 : index
    %57 = vector.load %arg2[%c264, %c0_21] : memref<304x96xf32, #tpu.memory_space<vmem>>, vector<32x16xf32>
    %58 = arith.truncf %57 : vector<32x16xf32> to vector<32x16xbf16>
    %59 = arith.truncf %56 : vector<256x32xf32> to vector<256x32xbf16>
    %cst_22 = arith.constant dense<0.000000e+00> : vector<256x16xf32>
    %60 = tpu.matmul %59, %58, %cst_22 {dimension_numbers = #tpu.dot_dimension_numbers<[1], [0], [0], [1], [0, 0, 1, 1], [], []>} : vector<256x32xbf16>, vector<32x16xbf16>, vector<256x16xf32> -> vector<256x16xf32>
    %c296 = arith.constant 296 : index
    %c0_23 = arith.constant 0 : index
    %61 = vector.load %arg2[%c296, %c0_23] : memref<304x96xf32, #tpu.memory_space<vmem>>, vector<1x16xf32>
    %62 = vector.broadcast %61 : vector<1x16xf32> to vector<256x16xf32>
    %63 = arith.addf %60, %62 : vector<256x16xf32>
    %cst_24 = arith.constant 0.000000e+00 : f32
    %64 = vector.broadcast %cst_24 : f32 to vector<256x96xf32>
    %65 = tpu.concatenate %31, %36, %63, %38, %20, %64 in 1 : vector<256x4xf32>, vector<256x4xf32>, vector<256x16xf32>, vector<256x4xf32>, vector<256x4xf32>, vector<256x96xf32> -> vector<256x128xf32>
    %c0_25 = arith.constant 0 : index
    %c0_26 = arith.constant 0 : index
    %66 = vector.load %arg3[%c0_25, %c0_26] : memref<256x128xf32, #tpu.memory_space<vmem>>, vector<256x128xf32>
    tpu.vector_store %arg3[%c0_25, %c0_26], %65 {strides = array<i32>} : memref<256x128xf32, #tpu.memory_space<vmem>>, vector<256x128xf32>,
    return
  }
  func.func @transform_0(%arg0: i32) -> (i32, i32) {
    %c0_i32 = arith.constant 0 : i32
    %c0_i32_0 = arith.constant 0 : i32
    return %arg0, %c0_i32 : i32, i32
  }
  func.func @transform_1(%arg0: i32) -> (i32, i32) {
    %c0_i32 = arith.constant 0 : i32
    %c0_i32_0 = arith.constant 0 : i32
    %c0_i32_1 = arith.constant 0 : i32
    return %c0_i32, %c0_i32_0 : i32, i32
  }
  func.func @transform_2(%arg0: i32) -> (i32, i32) {
    %c0_i32 = arith.constant 0 : i32
    %c0_i32_0 = arith.constant 0 : i32
    return %arg0, %c0_i32 : i32, i32
  }
}

</mosaic_0001>

<llo_original>
// kernel: _lambda_.1
$region0: #{_lambda_.1}
  #allocation0 [shape = 'u32[]', space=smem, size = 0x4, offset = 0x4, fixed_abs, tag = 'smem constant byte address 0x4 - core index']
  #allocation1 [shape = 'u32[144,128]{1,0:T(1,128)}', space=vmem, size = 0x12000, scoped, tag = 'internal scratch']
  %s0 = inlined_call_operand.vmem [shape: f32[512,128], index: 0, kind: input, shape index: {}]
  %s1 = inlined_call_operand.vmem [shape: f32[304,96], index: 1, kind: input, shape index: {}]
  %s2 = inlined_call_operand.vmem [shape: f32[512,128], index: 2, kind: output, shape index: {}]
  %s3 = sld [smem:[#allocation0]]
  $region41: #{_lambda_.1} parent=0
    _
  %s5 = ssub.s32 1, %s3
  %s6 = scalar_select 0, %s5, %s3
  loop: start=0, step=1, limit=4
  $region2: #{_lambda_.1} parent=0 // loop_pre_header
    _
  $region3: #{_lambda_.1} parent=0 // loop_header
    %s8 = sphi 0, %s12
    %p9 = scmp.ge.s32.totalorder %s8, 4
    %s18 = sphi 0, %s20
    %s21 = sphi 0, %s18
    %s22 = sphi 0, %s21
    %s38 = sphi 0, %s22
    %s42 = sphi 0, %s42
    %s44 = sphi 0, %s42
    %s45 = sphi 0, %s44
    %s59 = sphi 0, %s45
    %s65 = sphi 0, %s67
    %s68 = sphi 0, %s65
    %s69 = sphi 0, %s68
    %s85 = sphi 0, %s69
  $region4: #{_lambda_.1} parent=0 // loop_header_branch
    %11 = sbr.rel (%p9) target = $region8
  $region5: #{_lambda_.1} parent=0 // loop_body
    %s13 = ssub.s32 %s8, 1
    %s14 = ssub.s32 %s8, 2
    %s15 = sadd.s32 %s8, 1
    %s16 = ssub.s32 %s8, %s15
    %p17 = scmp.eq.s32.totalorder %s16, 0
    %s19 = sadd.s32 %s18, 1
    %s20 = scalar_select %p17, %s18, %s19
    %p23 = pneg %p17
    %p24 = scmp.eq.s32.totalorder %s8, 1
    %p25 = por %p23, %p24
    %p26 = scmp.ne.s32.totalorder %s18, %s21
    %p27 = scmp.eq.s32.totalorder %s8, 0
    %p28 = por %p26, %p27
    %p29 = scmp.ne.s32.totalorder %s18, %s21
    %p30 = scmp.eq.s32.totalorder %s13, 1
    %p31 = por %p29, %p30
    %p32 = scmp.ne.s32.totalorder %s21, %s22
    %p33 = scmp.eq.s32.totalorder %s13, 0
    %p34 = por %p32, %p33
    %p35 = scmp.ne.s32.totalorder %s21, %s22
    %p36 = scmp.eq.s32.totalorder %s14, 1
    %p37 = por %p35, %p36
    %p39 = scmp.ne.s32.totalorder %s22, %s38
    %p40 = scmp.eq.s32.totalorder %s14, 0
    %p41 = por %p39, %p40
    %s43 = sadd.s32 %s42, 1
    %p46 = scmp.eq.s32.totalorder %s8, 1
    %p47 = scmp.ne.s32.totalorder %s42, %s44
    %p48 = scmp.eq.s32.totalorder %s8, 0
    %p49 = por %p47, %p48
    %p50 = scmp.ne.s32.totalorder %s42, %s44
    %p51 = scmp.eq.s32.totalorder %s13, 1
    %p52 = por %p50, %p51
    %p53 = scmp.ne.s32.totalorder %s44, %s45
    %p54 = scmp.eq.s32.totalorder %s13, 0
    %p55 = por %p53, %p54
    %p56 = scmp.ne.s32.totalorder %s44, %s45
    %p57 = scmp.eq.s32.totalorder %s14, 1
    %p58 = por %p56, %p57
    %p60 = scmp.ne.s32.totalorder %s45, %s59
    %p61 = scmp.eq.s32.totalorder %s14, 0
    %p62 = por %p60, %p61
    %s63 = ssub.s32 %s8, %s15
    %p64 = scmp.eq.s32.totalorder %s63, 0
    %s66 = sadd.s32 %s65, 1
    %s67 = scalar_select %p64, %s65, %s66
    %p70 = pneg %p64
    %p71 = scmp.eq.s32.totalorder %s8, 1
    %p72 = por %p70, %p71
    %p73 = scmp.ne.s32.totalorder %s65, %s68
    %p74 = scmp.eq.s32.totalorder %s8, 0
    %p75 = por %p73, %p74
    %p76 = scmp.ne.s32.totalorder %s65, %s68
    %p77 = scmp.eq.s32.totalorder %s13, 1
    %p78 = por %p76, %p77
    %p79 = scmp.ne.s32.totalorder %s68, %s69
    %p80 = scmp.eq.s32.totalorder %s13, 0
    %p81 = por %p79, %p80
    %p82 = scmp.ne.s32.totalorder %s68, %s69
    %p83 = scmp.eq.s32.totalorder %s14, 1
    %p84 = por %p82, %p83
    %p86 = scmp.ne.s32.totalorder %s69, %s85
    %p87 = scmp.eq.s32.totalorder %s14, 0
    %p88 = por %p86, %p87
    %p89 = scmp.le.s32.totalorder 1, %s8
    %p90 = scmp.lt.s32.totalorder %s8, 3
    %p91 = pnand %p89, %p90
    %p92 = pneg %p91
    // Predicated region
    $region9: #{_lambda_.1} parent=5 // pred_check
      _
    $region10: #{_lambda_.1} parent=5 // pred_check_branch
      %94 = sbr.rel (%p91) target = $region12
    $region11: #{_lambda_.1} parent=5 // pred_region
      %s95 = ssub.s32 %s8, 1
      // Predicated region
      $region13: #{_lambda_.1} parent=11 // pred_check
        %p96 = pneg %p55
      $region14: #{_lambda_.1} parent=11 // pred_check_branch
        %98 = sbr.rel (%p96) target = $region16
      $region15: #{_lambda_.1} parent=11 // pred_region
        _
      $region16: #{_lambda_.1} parent=11 // pred_fallthru
        _
    $region12: #{_lambda_.1} parent=5 // pred_fallthru
      _
    %p99 = scmp.lt.s32.totalorder %s8, 2
    // Predicated region
    $region17: #{_lambda_.1} parent=5 // pred_check
      %p100 = pneg %p99
    $region18: #{_lambda_.1} parent=5 // pred_check_branch
      %102 = sbr.rel (%p100) target = $region20
    $region19: #{_lambda_.1} parent=5 // pred_region
      // Predicated region
      $region21: #{_lambda_.1} parent=19 // pred_check
        %p103 = pneg %p28
      $region22: #{_lambda_.1} parent=19 // pred_check_branch
        %105 = sbr.rel (%p103) target = $region24
      $region23: #{_lambda_.1} parent=19 // pred_region
        %s106 = smul.u32 32, %s8
        %p107 = scmp.lt.s32.totalorder %s106, 63
        %s108 = scalar_select %p107, %s106, 63
        %s109 = smul.addr %s108, 8
        %s110 = scalar_lea.vmem %s0, %s109
        %s111 = smul.u32 32, %s8
      $region24: #{_lambda_.1} parent=19 // pred_fallthru
        _
    $region20: #{_lambda_.1} parent=5 // pred_fallthru
      _
    %p112 = scmp.le.s32.totalorder 1, %s8
    %p113 = scmp.lt.s32.totalorder %s8, 3
    %p114 = pnand %p112, %p113
    %p115 = pneg %p114
    // Predicated region
    $region25: #{_lambda_.1} parent=5 // pred_check
      _
    $region26: #{_lambda_.1} parent=5 // pred_check_branch
      %117 = sbr.rel (%p114) target = $region28
    $region27: #{_lambda_.1} parent=5 // pred_region
      %s118 = ssub.s32 %s8, 1
      %s119 = smul.u32 32, %s13
      %p120 = scmp.lt.s32.totalorder %s119, 63
      %s121 = scalar_select %p120, %s119, 63
      %s122 = smul.addr %s121, 8
      %s123 = scalar_lea.vmem %s0, %s122
      %p124 = pneg %p34
      %p125 = pneg %p31
      %p126 = pneg %p55
      %p127 = pneg %p52
      %p128 = pneg %p81
      %p129 = pneg %p78
      %s130 = smul.u32 32, %s13
      %p131 = scmp.lt.s32.totalorder %s130, 63
      %s132 = scalar_select %p131, %s130, 63
      %s133 = smul.addr %s132, 8
      %s134 = scalar_lea.vmem %s2, %s133
      %s135 = smul.u32 32, %s13
      %p136 = scmp.lt.s32.totalorder %s135, 63
      %s137 = scalar_select %p136, %s135, 63
      %s138 = smul.addr %s137, 8
      %s139 = scalar_lea.vmem %s0, %s138
      %s140 = smul.u32 32, %s13
      %s141 = smul.u32 32, %s13
      %p142 = scmp.lt.s32.totalorder %s141, 63
      %s143 = scalar_select %p142, %s141, 63
      %s144 = smul.addr %s143, 8
      %s145 = scalar_lea.vmem %s2, %s144
      %s146 = smul.u32 32, %s13
      %v148 = vld [vmem:[%s139] sm:$0xff]
      %v149 = vld [vmem:[%s139 + $0x8] sm:$0xff]
      %v150 = vld [vmem:[%s139 + $0x10] sm:$0xff]
      %v151 = vld [vmem:[%s139 + $0x18] sm:$0xff]
      %v152 = vld [vmem:[%s139 + $0x20] sm:$0xff]
      %v153 = vld [vmem:[%s139 + $0x28] sm:$0xff]
      %v154 = vld [vmem:[%s139 + $0x30] sm:$0xff]
      %v155 = vld [vmem:[%s139 + $0x38] sm:$0xff]
      %v156 = vld [vmem:[%s139 + $0x40] sm:$0xff]
      %v157 = vld [vmem:[%s139 + $0x48] sm:$0xff]
      %v158 = vld [vmem:[%s139 + $0x50] sm:$0xff]
      %v159 = vld [vmem:[%s139 + $0x58] sm:$0xff]
      %v160 = vld [vmem:[%s139 + $0x60] sm:$0xff]
      %v161 = vld [vmem:[%s139 + $0x68] sm:$0xff]
      %v162 = vld [vmem:[%s139 + $0x70] sm:$0xff]
      %v163 = vld [vmem:[%s139 + $0x78] sm:$0xff]
      %v164 = vld [vmem:[%s139 + $0x80] sm:$0xff]
      %v165 = vld [vmem:[%s139 + $0x88] sm:$0xff]
      %v166 = vld [vmem:[%s139 + $0x90] sm:$0xff]
      %v167 = vld [vmem:[%s139 + $0x98] sm:$0xff]
      %v168 = vld [vmem:[%s139 + $0xa0] sm:$0xff]
      %v169 = vld [vmem:[%s139 + $0xa8] sm:$0xff]
      %v170 = vld [vmem:[%s139 + $0xb0] sm:$0xff]
      %v171 = vld [vmem:[%s139 + $0xb8] sm:$0xff]
      %v172 = vld [vmem:[%s139 + $0xc0] sm:$0xff]
      %v173 = vld [vmem:[%s139 + $0xc8] sm:$0xff]
      %v174 = vld [vmem:[%s139 + $0xd0] sm:$0xff]
      %v175 = vld [vmem:[%s139 + $0xd8] sm:$0xff]
      %v176 = vld [vmem:[%s139 + $0xe0] sm:$0xff]
      %v177 = vld [vmem:[%s139 + $0xe8] sm:$0xff]
      %v178 = vld [vmem:[%s139 + $0xf0] sm:$0xff]
      %v179 = vld [vmem:[%s139 + $0xf8] sm:$0xff]
      %v180 = vld [vmem:[%s1] sm:$0xff]
      %v181 = vld [vmem:[%s1 + $0x8] sm:$0xff]
      %v182 = vld [vmem:[%s1 + $0x10] sm:$0xff]
      %v183 = vpack.c.bf16 %v181, %v180
      %v184 = vpack.c.bf16 %v182, %v182
      %v185 = vpack.c.bf16 %v149, %v148
      %v186 = vpack.c.bf16 %v151, %v150
      %v187 = vpack.c.bf16 %v153, %v152
      %v188 = vpack.c.bf16 %v155, %v154
      %v189 = vpack.c.bf16 %v157, %v156
      %v190 = vpack.c.bf16 %v159, %v158
      %v191 = vpack.c.bf16 %v161, %v160
      %v192 = vpack.c.bf16 %v163, %v162
      %v193 = vpack.c.bf16 %v165, %v164
      %v194 = vpack.c.bf16 %v167, %v166
      %v195 = vpack.c.bf16 %v169, %v168
      %v196 = vpack.c.bf16 %v171, %v170
      %v197 = vpack.c.bf16 %v173, %v172
      %v198 = vpack.c.bf16 %v175, %v174
      %v199 = vpack.c.bf16 %v177, %v176
      %v200 = vpack.c.bf16 %v179, %v178
      %v201 = vld [vmem:[%s1 + $0x18] sm:$0x1]
      %v202 = vlaneseq
      %v203 = vshrl.u32 %v202, 7
      %v204 = vsub.s32 0, %v203
      %v205 = vrot.slane %v201, %v204
      %vm206 = vcmask 195584
      %v208 = vsel %vm206, %v185, 0
      %v211 = vsel %vm206, %v186, 0
      %v214 = vsel %vm206, %v187, 0
      %v217 = vsel %vm206, %v188, 0
      %v220 = vsel %vm206, %v189, 0
      %v223 = vsel %vm206, %v190, 0
      %v226 = vsel %vm206, %v191, 0
      %v229 = vsel %vm206, %v192, 0
      %v232 = vsel %vm206, %v193, 0
      %v235 = vsel %vm206, %v194, 0
      %v238 = vsel %vm206, %v195, 0
      %v241 = vsel %vm206, %v196, 0
      %v244 = vsel %vm206, %v197, 0
      %v247 = vsel %vm206, %v198, 0
      %v250 = vsel %vm206, %v199, 0
      %v253 = vsel %vm206, %v200, 0
      %vm255 = vcmask 1043456
      %v257 = vsel %vm255, %v184, 0
      %259 = vmatprep.subr.bf16.mxu0 0
      %260 = vmatpush1.bf16.msra.mxu0 0
      %261 = vmatprep.subr.bf16.mxu0 0
      %262 = vmatpush1.bf16.msra.mxu0 0
      %263 = vmatprep.subr.bf16.mxu0 0
      %264 = vmatpush1.bf16.msra.mxu0 0
      %265 = vmatprep.subr.bf16.mxu0 0
      %266 = vmatpush1.bf16.msra.mxu0 0
      %267 = vmatprep.subr.bf16.mxu0 0
      %268 = vmatpush1.bf16.msra.mxu0 0
      %269 = vmatprep.subr.bf16.mxu0 0
      %270 = vmatpush1.bf16.msra.mxu0 0
      %271 = vmatprep.subr.bf16.mxu0 0
      %272 = vmatpush1.bf16.msra.mxu0 %v257
      %273 = vmatprep.subr.bf16.mxu0 0
      %274 = vmatpush1.bf16.msra.mxu0 %v183
      %275 = vmatprep.subr.bf16.mxu0 0
      %276 = vmatpush2.bf16.msra.mxu0 0
      %277 = vmatprep.subr.bf16.mxu0 0
      %278 = vmatpush2.bf16.msra.mxu0 0
      %279 = vmatprep.subr.bf16.mxu0 0
      %280 = vmatpush2.bf16.msra.mxu0 0
      %281 = vmatprep.subr.bf16.mxu0 0
      %282 = vmatpush2.bf16.msra.mxu0 0
      %283 = vmatprep.subr.bf16.mxu0 0
      %284 = vmatpush2.bf16.msra.mxu0 0
      %285 = vmatprep.subr.bf16.mxu0 0
      %286 = vmatpush2.bf16.msra.mxu0 0
      %287 = vmatprep.subr.bf16.mxu0 0
      %288 = vmatpush2.bf16.msra.mxu0 0
      %289 = vmatprep.subr.bf16.mxu0 0
      %290 = vmatpush2.bf16.msra.mxu0 0
      %291 = vmatprep.mubr.bf16.mxu0 0
      %292 = vmatmul.mubr.bf16.gmra.mxu0 %v208
      %v293 = vpop.f32.mrf.mxu0
      %v294 = vadd.f32 %v205, %v293
      %v295 = vpop.f32.mrf.mxu0
      %v296 = vpop.f32.mrf.mxu0
      %v297 = vadd.f32 %v205, %v296
      %v298 = vpop.f32.mrf.mxu0
      %299 = vmatprep.mubr.bf16.mxu0 0
      %300 = vmatmul.mubr.bf16.gmra.mxu0 %v211
      %v301 = vpop.f32.mrf.mxu0
      %v302 = vadd.f32 %v205, %v301
      %v303 = vpop.f32.mrf.mxu0
      %v304 = vpop.f32.mrf.mxu0
      %v305 = vadd.f32 %v205, %v304
      %v306 = vpop.f32.mrf.mxu0
      %307 = vmatprep.mubr.bf16.mxu0 0
      %308 = vmatmul.mubr.bf16.gmra.mxu0 %v214
      %v309 = vpop.f32.mrf.mxu0
      %v310 = vadd.f32 %v205, %v309
      %v311 = vpop.f32.mrf.mxu0
      %v312 = vpop.f32.mrf.mxu0
      %v313 = vadd.f32 %v205, %v312
      %v314 = vpop.f32.mrf.mxu0
      %315 = vmatprep.mubr.bf16.mxu0 0
      %316 = vmatmul.mubr.bf16.gmra.mxu0 %v217
      %v317 = vpop.f32.mrf.mxu0
      %v318 = vadd.f32 %v205, %v317
      %v319 = vpop.f32.mrf.mxu0
      %v320 = vpop.f32.mrf.mxu0
      %v321 = vadd.f32 %v205, %v320
      %v322 = vpop.f32.mrf.mxu0
      %323 = vmatprep.mubr.bf16.mxu0 0
      %324 = vmatmul.mubr.bf16.gmra.mxu0 %v220
      %v325 = vpop.f32.mrf.mxu0
      %v326 = vadd.f32 %v205, %v325
      %v327 = vpop.f32.mrf.mxu0
      %v328 = vpop.f32.mrf.mxu0
      %v329 = vadd.f32 %v205, %v328
      %v330 = vpop.f32.mrf.mxu0
      %331 = vmatprep.mubr.bf16.mxu0 0
      %332 = vmatmul.mubr.bf16.gmra.mxu0 %v223
      %v333 = vpop.f32.mrf.mxu0
      %v334 = vadd.f32 %v205, %v333
      %v335 = vpop.f32.mrf.mxu0
      %v336 = vpop.f32.mrf.mxu0
      %v337 = vadd.f32 %v205, %v336
      %v338 = vpop.f32.mrf.mxu0
      %339 = vmatprep.mubr.bf16.mxu0 0
      %340 = vmatmul.mubr.bf16.gmra.mxu0 %v226
      %v341 = vpop.f32.mrf.mxu0
      %v342 = vadd.f32 %v205, %v341
      %v343 = vpop.f32.mrf.mxu0
      %v344 = vpop.f32.mrf.mxu0
      %v345 = vadd.f32 %v205, %v344
      %v346 = vpop.f32.mrf.mxu0
      %347 = vmatprep.mubr.bf16.mxu0 0
      %348 = vmatmul.mubr.bf16.gmra.mxu0 %v229
      %v349 = vpop.f32.mrf.mxu0
      %v350 = vadd.f32 %v205, %v349
      %v351 = vpop.f32.mrf.mxu0
      %v352 = vpop.f32.mrf.mxu0
      %v353 = vadd.f32 %v205, %v352
      %v354 = vpop.f32.mrf.mxu0
      %355 = vmatprep.mubr.bf16.mxu0 0
      %356 = vmatmul.mubr.bf16.gmra.mxu0 %v232
      %v357 = vpop.f32.mrf.mxu0
      %v358 = vadd.f32 %v205, %v357
      %v359 = vpop.f32.mrf.mxu0
      %v360 = vpop.f32.mrf.mxu0
      %v361 = vadd.f32 %v205, %v360
      %v362 = vpop.f32.mrf.mxu0
      %363 = vmatprep.mubr.bf16.mxu0 0
      %364 = vmatmul.mubr.bf16.gmra.mxu0 %v235
      %v365 = vpop.f32.mrf.mxu0
      %v366 = vadd.f32 %v205, %v365
      %v367 = vpop.f32.mrf.mxu0
      %v368 = vpop.f32.mrf.mxu0
      %v369 = vadd.f32 %v205, %v368
      %v370 = vpop.f32.mrf.mxu0
      %371 = vmatprep.mubr.bf16.mxu0 0
      %372 = vmatmul.mubr.bf16.gmra.mxu0 %v238
      %v373 = vpop.f32.mrf.mxu0
      %v374 = vadd.f32 %v205, %v373
      %v375 = vpop.f32.mrf.mxu0
      %v376 = vpop.f32.mrf.mxu0
      %v377 = vadd.f32 %v205, %v376
      %v378 = vpop.f32.mrf.mxu0
      %379 = vmatprep.mubr.bf16.mxu0 0
      %380 = vmatmul.mubr.bf16.gmra.mxu0 %v241
      %v381 = vpop.f32.mrf.mxu0
      %v382 = vadd.f32 %v205, %v381
      %v383 = vpop.f32.mrf.mxu0
      %v384 = vpop.f32.mrf.mxu0
      %v385 = vadd.f32 %v205, %v384
      %v386 = vpop.f32.mrf.mxu0
      %387 = vmatprep.mubr.bf16.mxu0 0
      %388 = vmatmul.mubr.bf16.gmra.mxu0 %v244
      %v389 = vpop.f32.mrf.mxu0
      %v390 = vadd.f32 %v205, %v389
      %v391 = vpop.f32.mrf.mxu0
      %v392 = vpop.f32.mrf.mxu0
      %v393 = vadd.f32 %v205, %v392
      %v394 = vpop.f32.mrf.mxu0
      %395 = vmatprep.mubr.bf16.mxu0 0
      %396 = vmatmul.mubr.bf16.gmra.mxu0 %v247
      %v397 = vpop.f32.mrf.mxu0
      %v398 = vadd.f32 %v205, %v397
      %v399 = vpop.f32.mrf.mxu0
      %v400 = vpop.f32.mrf.mxu0
      %v401 = vadd.f32 %v205, %v400
      %v402 = vpop.f32.mrf.mxu0
      %403 = vmatprep.mubr.bf16.mxu0 0
      %404 = vmatmul.mubr.bf16.gmra.mxu0 %v250
      %v405 = vpop.f32.mrf.mxu0
      %v406 = vadd.f32 %v205, %v405
      %v407 = vpop.f32.mrf.mxu0
      %v408 = vpop.f32.mrf.mxu0
      %v409 = vadd.f32 %v205, %v408
      %v410 = vpop.f32.mrf.mxu0
      %411 = vmatprep.mubr.bf16.mxu0 0
      %412 = vmatmul.mubr.bf16.gmra.mxu0 %v253
      %v413 = vpop.f32.mrf.mxu0
      %v414 = vadd.f32 %v205, %v413
      %v415 = vpop.f32.mrf.mxu0
      %v416 = vpop.f32.mrf.mxu0
      %v417 = vadd.f32 %v205, %v416
      %v418 = vpop.f32.mrf.mxu0
      %419 = vdwg.mxu0
      %v420 = vmax.f32 %v294, 0.0
      %v421 = vmax.f32 %v297, 0.0
      %v422 = vmax.f32 %v302, 0.0
      %v423 = vmax.f32 %v305, 0.0
      %v424 = vmax.f32 %v310, 0.0
      %v425 = vmax.f32 %v313, 0.0
      %v426 = vmax.f32 %v318, 0.0
      %v427 = vmax.f32 %v321, 0.0
      %v428 = vmax.f32 %v326, 0.0
      %v429 = vmax.f32 %v329, 0.0
      %v430 = vmax.f32 %v334, 0.0
      %v431 = vmax.f32 %v337, 0.0
      %v432 = vmax.f32 %v342, 0.0
      %v433 = vmax.f32 %v345, 0.0
      %v434 = vmax.f32 %v350, 0.0
      %v435 = vmax.f32 %v353, 0.0
      %v436 = vmax.f32 %v358, 0.0
      %v437 = vmax.f32 %v361, 0.0
      %v438 = vmax.f32 %v366, 0.0
      %v439 = vmax.f32 %v369, 0.0
      %v440 = vmax.f32 %v374, 0.0
      %v441 = vmax.f32 %v377, 0.0
      %v442 = vmax.f32 %v382, 0.0
      %v443 = vmax.f32 %v385, 0.0
      %v444 = vmax.f32 %v390, 0.0
      %v445 = vmax.f32 %v393, 0.0
      %v446 = vmax.f32 %v398, 0.0
      %v447 = vmax.f32 %v401, 0.0
      %v448 = vmax.f32 %v406, 0.0
      %v449 = vmax.f32 %v409, 0.0
      %v450 = vmax.f32 %v414, 0.0
      %v451 = vmax.f32 %v417, 0.0
      %v452 = vld [vmem:[%s1 + $0x20] sm:$0xff]
      %v453 = vld [vmem:[%s1 + $0x28] sm:$0xff]
      %v454 = vld [vmem:[%s1 + $0x30] sm:$0xff]
      %v455 = vld [vmem:[%s1 + $0x38] sm:$0xff]
      %v456 = vld [vmem:[%s1 + $0x40] sm:$0xff]
      %v457 = vld [vmem:[%s1 + $0x48] sm:$0xff]
      %v458 = vld [vmem:[%s1 + $0x50] sm:$0xff]
      %v459 = vld [vmem:[%s1 + $0x58] sm:$0xff]
      %v460 = vld [vmem:[%s1 + $0x60] sm:$0xff]
      %v461 = vld [vmem:[%s1 + $0x68] sm:$0xff]
      %v462 = vld [vmem:[%s1 + $0x70] sm:$0xff]
      %v463 = vld [vmem:[%s1 + $0x78] sm:$0xff]
      %v464 = vpack.c.bf16 %v453, %v452
      %v465 = vpack.c.bf16 %v455, %v454
      %v466 = vpack.c.bf16 %v457, %v456
      %v467 = vpack.c.bf16 %v459, %v458
      %v468 = vpack.c.bf16 %v461, %v460
      %v469 = vpack.c.bf16 %v463, %v462
      %v470 = vpack.c.bf16 %v421, %v420
      %v471 = vpack.c.bf16 %v423, %v422
      %v472 = vpack.c.bf16 %v425, %v424
      %v473 = vpack.c.bf16 %v427, %v426
      %v474 = vpack.c.bf16 %v429, %v428
      %v475 = vpack.c.bf16 %v431, %v430
      %v476 = vpack.c.bf16 %v433, %v432
      %v477 = vpack.c.bf16 %v435, %v434
      %v478 = vpack.c.bf16 %v437, %v436
      %v479 = vpack.c.bf16 %v439, %v438
      %v480 = vpack.c.bf16 %v441, %v440
      %v481 = vpack.c.bf16 %v443, %v442
      %v482 = vpack.c.bf16 %v445, %v444
      %v483 = vpack.c.bf16 %v447, %v446
      %v484 = vpack.c.bf16 %v449, %v448
      %v485 = vpack.c.bf16 %v451, %v450
      %v486 = vld [vmem:[%s1 + $0x80] sm:$0x1]
      %v487 = vlaneseq
      %v488 = vshrl.u32 %v487, 7
      %v489 = vsub.s32 0, %v488
      %v490 = vrot.slane %v486, %v489
      %vm491 = vcmask 785408
      %v493 = vsel %vm491, %v470, 0
      %v496 = vsel %vm491, %v471, 0
      %v499 = vsel %vm491, %v472, 0
      %v502 = vsel %vm491, %v473, 0
      %v505 = vsel %vm491, %v474, 0
      %v508 = vsel %vm491, %v475, 0
      %v511 = vsel %vm491, %v476, 0
      %v514 = vsel %vm491, %v477, 0
      %v517 = vsel %vm491, %v478, 0
      %v520 = vsel %vm491, %v479, 0
      %v523 = vsel %vm491, %v480, 0
      %v526 = vsel %vm491, %v481, 0
      %v529 = vsel %vm491, %v482, 0
      %v532 = vsel %vm491, %v483, 0
      %v535 = vsel %vm491, %v484, 0
      %v538 = vsel %vm491, %v485, 0
      %540 = vmatprep.subr.bf16.mxu0 0
      %541 = vmatpush1.bf16.msra.mxu0 0
      %542 = vmatprep.subr.bf16.mxu0 0
      %543 = vmatpush1.bf16.msra.mxu0 0
      %544 = vmatprep.subr.bf16.mxu0 0
      %545 = vmatpush1.bf16.msra.mxu0 %v469
      %546 = vmatprep.subr.bf16.mxu0 0
      %547 = vmatpush1.bf16.msra.mxu0 %v468
      %548 = vmatprep.subr.bf16.mxu0 0
      %549 = vmatpush1.bf16.msra.mxu0 %v467
      %550 = vmatprep.subr.bf16.mxu0 0
      %551 = vmatpush1.bf16.msra.mxu0 %v466
      %552 = vmatprep.subr.bf16.mxu0 0
      %553 = vmatpush1.bf16.msra.mxu0 %v465
      %554 = vmatprep.subr.bf16.mxu0 0
      %555 = vmatpush1.bf16.msra.mxu0 %v464
      %556 = vmatprep.subr.bf16.mxu0 0
      %557 = vmatpush2.bf16.msra.mxu0 0
      %558 = vmatprep.subr.bf16.mxu0 0
      %559 = vmatpush2.bf16.msra.mxu0 0
      %560 = vmatprep.subr.bf16.mxu0 0
      %561 = vmatpush2.bf16.msra.mxu0 0
      %562 = vmatprep.subr.bf16.mxu0 0
      %563 = vmatpush2.bf16.msra.mxu0 0
      %564 = vmatprep.subr.bf16.mxu0 0
      %565 = vmatpush2.bf16.msra.mxu0 0
      %566 = vmatprep.subr.bf16.mxu0 0
      %567 = vmatpush2.bf16.msra.mxu0 0
      %568 = vmatprep.subr.bf16.mxu0 0
      %569 = vmatpush2.bf16.msra.mxu0 0
      %570 = vmatprep.subr.bf16.mxu0 0
      %571 = vmatpush2.bf16.msra.mxu0 0
      %572 = vmatprep.mubr.bf16.mxu0 0
      %573 = vmatmul.mubr.bf16.gmra.mxu0 %v493
      %v574 = vpop.f32.mrf.mxu0
      %v575 = vadd.f32 %v490, %v574
      %v576 = vpop.f32.mrf.mxu0
      %v577 = vpop.f32.mrf.mxu0
      %v578 = vadd.f32 %v490, %v577
      %v579 = vpop.f32.mrf.mxu0
      %580 = vmatprep.mubr.bf16.mxu0 0
      %581 = vmatmul.mubr.bf16.gmra.mxu0 %v496
      %v582 = vpop.f32.mrf.mxu0
      %v583 = vadd.f32 %v490, %v582
      %v584 = vpop.f32.mrf.mxu0
      %v585 = vpop.f32.mrf.mxu0
      %v586 = vadd.f32 %v490, %v585
      %v587 = vpop.f32.mrf.mxu0
      %588 = vmatprep.mubr.bf16.mxu0 0
      %589 = vmatmul.mubr.bf16.gmra.mxu0 %v499
      %v590 = vpop.f32.mrf.mxu0
      %v591 = vadd.f32 %v490, %v590
      %v592 = vpop.f32.mrf.mxu0
      %v593 = vpop.f32.mrf.mxu0
      %v594 = vadd.f32 %v490, %v593
      %v595 = vpop.f32.mrf.mxu0
      %596 = vmatprep.mubr.bf16.mxu0 0
      %597 = vmatmul.mubr.bf16.gmra.mxu0 %v502
      %v598 = vpop.f32.mrf.mxu0
      %v599 = vadd.f32 %v490, %v598
      %v600 = vpop.f32.mrf.mxu0
      %v601 = vpop.f32.mrf.mxu0
      %v602 = vadd.f32 %v490, %v601
      %v603 = vpop.f32.mrf.mxu0
      %604 = vmatprep.mubr.bf16.mxu0 0
      %605 = vmatmul.mubr.bf16.gmra.mxu0 %v505
      %v606 = vpop.f32.mrf.mxu0
      %v607 = vadd.f32 %v490, %v606
      %v608 = vpop.f32.mrf.mxu0
      %v609 = vpop.f32.mrf.mxu0
      %v610 = vadd.f32 %v490, %v609
      %v611 = vpop.f32.mrf.mxu0
      %612 = vmatprep.mubr.bf16.mxu0 0
      %613 = vmatmul.mubr.bf16.gmra.mxu0 %v508
      %v614 = vpop.f32.mrf.mxu0
      %v615 = vadd.f32 %v490, %v614
      %v616 = vpop.f32.mrf.mxu0
      %v617 = vpop.f32.mrf.mxu0
      %v618 = vadd.f32 %v490, %v617
      %v619 = vpop.f32.mrf.mxu0
      %620 = vmatprep.mubr.bf16.mxu0 0
      %621 = vmatmul.mubr.bf16.gmra.mxu0 %v511
      %v622 = vpop.f32.mrf.mxu0
      %v623 = vadd.f32 %v490, %v622
      %v624 = vpop.f32.mrf.mxu0
      %v625 = vpop.f32.mrf.mxu0
      %v626 = vadd.f32 %v490, %v625
      %v627 = vpop.f32.mrf.mxu0
      %628 = vmatprep.mubr.bf16.mxu0 0
      %629 = vmatmul.mubr.bf16.gmra.mxu0 %v514
      %v630 = vpop.f32.mrf.mxu0
      %v631 = vadd.f32 %v490, %v630
      %v632 = vpop.f32.mrf.mxu0
      %v633 = vpop.f32.mrf.mxu0
      %v634 = vadd.f32 %v490, %v633
      %v635 = vpop.f32.mrf.mxu0
      %636 = vmatprep.mubr.bf16.mxu0 0
      %637 = vmatmul.mubr.bf16.gmra.mxu0 %v517
      %v638 = vpop.f32.mrf.mxu0
      %v639 = vadd.f32 %v490, %v638
      %v640 = vpop.f32.mrf.mxu0
      %v641 = vpop.f32.mrf.mxu0
      %v642 = vadd.f32 %v490, %v641
      %v643 = vpop.f32.mrf.mxu0
      %644 = vmatprep.mubr.bf16.mxu0 0
      %645 = vmatmul.mubr.bf16.gmra.mxu0 %v520
      %v646 = vpop.f32.mrf.mxu0
      %v647 = vadd.f32 %v490, %v646
      %v648 = vpop.f32.mrf.mxu0
      %v649 = vpop.f32.mrf.mxu0
      %v650 = vadd.f32 %v490, %v649
      %v651 = vpop.f32.mrf.mxu0
      %652 = vmatprep.mubr.bf16.mxu0 0
      %653 = vmatmul.mubr.bf16.gmra.mxu0 %v523
      %v654 = vpop.f32.mrf.mxu0
      %v655 = vadd.f32 %v490, %v654
      %v656 = vpop.f32.mrf.mxu0
      %v657 = vpop.f32.mrf.mxu0
      %v658 = vadd.f32 %v490, %v657
      %v659 = vpop.f32.mrf.mxu0
      %660 = vmatprep.mubr.bf16.mxu0 0
      %661 = vmatmul.mubr.bf16.gmra.mxu0 %v526
      %v662 = vpop.f32.mrf.mxu0
      %v663 = vadd.f32 %v490, %v662
      %v664 = vpop.f32.mrf.mxu0
      %v665 = vpop.f32.mrf.mxu0
      %v666 = vadd.f32 %v490, %v665
      %v667 = vpop.f32.mrf.mxu0
      %668 = vmatprep.mubr.bf16.mxu0 0
      %669 = vmatmul.mubr.bf16.gmra.mxu0 %v529
      %v670 = vpop.f32.mrf.mxu0
      %v671 = vadd.f32 %v490, %v670
      %v672 = vpop.f32.mrf.mxu0
      %v673 = vpop.f32.mrf.mxu0
      %v674 = vadd.f32 %v490, %v673
      %v675 = vpop.f32.mrf.mxu0
      %676 = vmatprep.mubr.bf16.mxu0 0
      %677 = vmatmul.mubr.bf16.gmra.mxu0 %v532
      %v678 = vpop.f32.mrf.mxu0
      %v679 = vadd.f32 %v490, %v678
      %v680 = vpop.f32.mrf.mxu0
      %v681 = vpop.f32.mrf.mxu0
      %v682 = vadd.f32 %v490, %v681
      %v683 = vpop.f32.mrf.mxu0
      %684 = vmatprep.mubr.bf16.mxu0 0
      %685 = vmatmul.mubr.bf16.gmra.mxu0 %v535
      %v686 = vpop.f32.mrf.mxu0
      %v687 = vadd.f32 %v490, %v686
      %v688 = vpop.f32.mrf.mxu0
      %v689 = vpop.f32.mrf.mxu0
      %v690 = vadd.f32 %v490, %v689
      %v691 = vpop.f32.mrf.mxu0
      %692 = vmatprep.mubr.bf16.mxu0 0
      %693 = vmatmul.mubr.bf16.gmra.mxu0 %v538
      %v694 = vpop.f32.mrf.mxu0
      %v695 = vadd.f32 %v490, %v694
      %v696 = vpop.f32.mrf.mxu0
      %v697 = vpop.f32.mrf.mxu0
      %v698 = vadd.f32 %v490, %v697
      %v699 = vpop.f32.mrf.mxu0
      %700 = vdwg.mxu0
      %v701 = vmul.f32 %v575, 1.442695
      %v702 = vpow.pop %v701
      %v703 = vmul.f32 %v578, 1.442695
      %v704 = vpow.pop %v703
      %v705 = vmul.f32 %v583, 1.442695
      %v706 = vpow.pop %v705
      %v707 = vmul.f32 %v586, 1.442695
      %v708 = vpow.pop %v707
      %v709 = vmul.f32 %v591, 1.442695
      %v710 = vpow.pop %v709
      %v711 = vmul.f32 %v594, 1.442695
      %v712 = vpow.pop %v711
      %v713 = vmul.f32 %v599, 1.442695
      %v714 = vpow.pop %v713
      %v715 = vmul.f32 %v602, 1.442695
      %v716 = vpow.pop %v715
      %v717 = vmul.f32 %v607, 1.442695
      %v718 = vpow.pop %v717
      %v719 = vmul.f32 %v610, 1.442695
      %v720 = vpow.pop %v719
      %v721 = vmul.f32 %v615, 1.442695
      %v722 = vpow.pop %v721
      %v723 = vmul.f32 %v618, 1.442695
      %v724 = vpow.pop %v723
      %v725 = vmul.f32 %v623, 1.442695
      %v726 = vpow.pop %v725
      %v727 = vmul.f32 %v626, 1.442695
      %v728 = vpow.pop %v727
      %v729 = vmul.f32 %v631, 1.442695
      %v730 = vpow.pop %v729
      %v731 = vmul.f32 %v634, 1.442695
      %v732 = vpow.pop %v731
      %v733 = vmul.f32 %v639, 1.442695
      %v734 = vpow.pop %v733
      %v735 = vmul.f32 %v642, 1.442695
      %v736 = vpow.pop %v735
      %v737 = vmul.f32 %v647, 1.442695
      %v738 = vpow.pop %v737
      %v739 = vmul.f32 %v650, 1.442695
      %v740 = vpow.pop %v739
      %v741 = vmul.f32 %v655, 1.442695
      %v742 = vpow.pop %v741
      %v743 = vmul.f32 %v658, 1.442695
      %v744 = vpow.pop %v743
      %v745 = vmul.f32 %v663, 1.442695
      %v746 = vpow.pop %v745
      %v747 = vmul.f32 %v666, 1.442695
      %v748 = vpow.pop %v747
      %v749 = vmul.f32 %v671, 1.442695
      %v750 = vpow.pop %v749
      %v751 = vmul.f32 %v674, 1.442695
      %v752 = vpow.pop %v751
      %v753 = vmul.f32 %v679, 1.442695
      %v754 = vpow.pop %v753
      %v755 = vmul.f32 %v682, 1.442695
      %v756 = vpow.pop %v755
      %v757 = vmul.f32 %v687, 1.442695
      %v758 = vpow.pop %v757
      %v759 = vmul.f32 %v690, 1.442695
      %v760 = vpow.pop %v759
      %v761 = vmul.f32 %v695, 1.442695
      %v762 = vpow.pop %v761
      %v763 = vmul.f32 %v698, 1.442695
      %v764 = vpow.pop %v763
      %v765 = vmax.f32 %v575, 0.0
      %v766 = vmax.f32 %v578, 0.0
      %v767 = vmax.f32 %v583, 0.0
      %v768 = vmax.f32 %v586, 0.0
      %v769 = vmax.f32 %v591, 0.0
      %v770 = vmax.f32 %v594, 0.0
      %v771 = vmax.f32 %v599, 0.0
      %v772 = vmax.f32 %v602, 0.0
      %v773 = vmax.f32 %v607, 0.0
      %v774 = vmax.f32 %v610, 0.0
      %v775 = vmax.f32 %v615, 0.0
      %v776 = vmax.f32 %v618, 0.0
      %v777 = vmax.f32 %v623, 0.0
      %v778 = vmax.f32 %v626, 0.0
      %v779 = vmax.f32 %v631, 0.0
      %v780 = vmax.f32 %v634, 0.0
      %v781 = vmax.f32 %v639, 0.0
      %v782 = vmax.f32 %v642, 0.0
      %v783 = vmax.f32 %v647, 0.0
      %v784 = vmax.f32 %v650, 0.0
      %v785 = vmax.f32 %v655, 0.0
      %v786 = vmax.f32 %v658, 0.0
      %v787 = vmax.f32 %v663, 0.0
      %v788 = vmax.f32 %v666, 0.0
      %v789 = vmax.f32 %v671, 0.0
      %v790 = vmax.f32 %v674, 0.0
      %v791 = vmax.f32 %v679, 0.0
      %v792 = vmax.f32 %v682, 0.0
      %v793 = vmax.f32 %v687, 0.0
      %v794 = vmax.f32 %v690, 0.0
      %v795 = vmax.f32 %v695, 0.0
      %v796 = vmax.f32 %v698, 0.0
      %v797 = vld [vmem:[%s1 + $0x88] sm:$0xff]
      %v798 = vld [vmem:[%s1 + $0x90] sm:$0xff]
      %v799 = vld [vmem:[%s1 + $0x98] sm:$0xff]
      %v800 = vld [vmem:[%s1 + $0xa0] sm:$0xff]
      %v801 = vld [vmem:[%s1 + $0xa8] sm:$0xff]
      %v802 = vld [vmem:[%s1 + $0xb0] sm:$0xff]
      %v803 = vld [vmem:[%s1 + $0xb8] sm:$0xff]
      %v804 = vld [vmem:[%s1 + $0xc0] sm:$0xff]
      %v805 = vpack.c.bf16 %v798, %v797
      %v806 = vpack.c.bf16 %v800, %v799
      %v807 = vpack.c.bf16 %v802, %v801
      %v808 = vpack.c.bf16 %v804, %v803
      %v809 = vpack.c.bf16 %v766, %v765
      %v810 = vpack.c.bf16 %v768, %v767
      %v811 = vpack.c.bf16 %v770, %v769
      %v812 = vpack.c.bf16 %v772, %v771
      %v813 = vpack.c.bf16 %v774, %v773
      %v814 = vpack.c.bf16 %v776, %v775
      %v815 = vpack.c.bf16 %v778, %v777
      %v816 = vpack.c.bf16 %v780, %v779
      %v817 = vpack.c.bf16 %v782, %v781
      %v818 = vpack.c.bf16 %v784, %v783
      %v819 = vpack.c.bf16 %v786, %v785
      %v820 = vpack.c.bf16 %v788, %v787
      %v821 = vpack.c.bf16 %v790, %v789
      %v822 = vpack.c.bf16 %v792, %v791
      %v823 = vpack.c.bf16 %v794, %v793
      %v824 = vpack.c.bf16 %v796, %v795
      %v825 = vld [vmem:[%s1 + $0xc8] sm:$0x1]
      %v826 = vlaneseq
      %v827 = vshrl.u32 %v826, 7
      %v828 = vsub.s32 0, %v827
      %v829 = vrot.slane %v825, %v828
      %vm830 = vcmask 523264
      %v832 = vsel %vm830, %v809, 0
      %v835 = vsel %vm830, %v810, 0
      %v838 = vsel %vm830, %v811, 0
      %v841 = vsel %vm830, %v812, 0
      %v844 = vsel %vm830, %v813, 0
      %v847 = vsel %vm830, %v814, 0
      %v850 = vsel %vm830, %v815, 0
      %v853 = vsel %vm830, %v816, 0
      %v856 = vsel %vm830, %v817, 0
      %v859 = vsel %vm830, %v818, 0
      %v862 = vsel %vm830, %v819, 0
      %v865 = vsel %vm830, %v820, 0
      %v868 = vsel %vm830, %v821, 0
      %v871 = vsel %vm830, %v822, 0
      %v874 = vsel %vm830, %v823, 0
      %v877 = vsel %vm830, %v824, 0
      %879 = vmatprep.subr.bf16.mxu0 0
      %880 = vmatpush1.bf16.msra.mxu0 0
      %881 = vmatprep.subr.bf16.mxu0 0
      %882 = vmatpush1.bf16.msra.mxu0 0
      %883 = vmatprep.subr.bf16.mxu0 0
      %884 = vmatpush1.bf16.msra.mxu0 0
      %885 = vmatprep.subr.bf16.mxu0 0
      %886 = vmatpush1.bf16.msra.mxu0 0
      %887 = vmatprep.subr.bf16.mxu0 0
      %888 = vmatpush1.bf16.msra.mxu0 %v808
      %889 = vmatprep.subr.bf16.mxu0 0
      %890 = vmatpush1.bf16.msra.mxu0 %v807
      %891 = vmatprep.subr.bf16.mxu0 0
      %892 = vmatpush1.bf16.msra.mxu0 %v806
      %893 = vmatprep.subr.bf16.mxu0 0
      %894 = vmatpush1.bf16.msra.mxu0 %v805
      %895 = vmatprep.subr.bf16.mxu0 0
      %896 = vmatpush2.bf16.msra.mxu0 0
      %897 = vmatprep.subr.bf16.mxu0 0
      %898 = vmatpush2.bf16.msra.mxu0 0
      %899 = vmatprep.subr.bf16.mxu0 0
      %900 = vmatpush2.bf16.msra.mxu0 0
      %901 = vmatprep.subr.bf16.mxu0 0
      %902 = vmatpush2.bf16.msra.mxu0 0
      %903 = vmatprep.subr.bf16.mxu0 0
      %904 = vmatpush2.bf16.msra.mxu0 0
      %905 = vmatprep.subr.bf16.mxu0 0
      %906 = vmatpush2.bf16.msra.mxu0 0
      %907 = vmatprep.subr.bf16.mxu0 0
      %908 = vmatpush2.bf16.msra.mxu0 0
      %909 = vmatprep.subr.bf16.mxu0 0
      %910 = vmatpush2.bf16.msra.mxu0 0
      %911 = vmatprep.mubr.bf16.mxu0 0
      %912 = vmatmul.mubr.bf16.gmra.mxu0 %v832
      %v913 = vpop.f32.mrf.mxu0
      %v914 = vadd.f32 %v829, %v913
      %v915 = vpop.f32.mrf.mxu0
      %v916 = vpop.f32.mrf.mxu0
      %v917 = vadd.f32 %v829, %v916
      %v918 = vpop.f32.mrf.mxu0
      %919 = vmatprep.mubr.bf16.mxu0 0
      %920 = vmatmul.mubr.bf16.gmra.mxu0 %v835
      %v921 = vpop.f32.mrf.mxu0
      %v922 = vadd.f32 %v829, %v921
      %v923 = vpop.f32.mrf.mxu0
      %v924 = vpop.f32.mrf.mxu0
      %v925 = vadd.f32 %v829, %v924
      %v926 = vpop.f32.mrf.mxu0
      %927 = vmatprep.mubr.bf16.mxu0 0
      %928 = vmatmul.mubr.bf16.gmra.mxu0 %v838
      %v929 = vpop.f32.mrf.mxu0
      %v930 = vadd.f32 %v829, %v929
      %v931 = vpop.f32.mrf.mxu0
      %v932 = vpop.f32.mrf.mxu0
      %v933 = vadd.f32 %v829, %v932
      %v934 = vpop.f32.mrf.mxu0
      %935 = vmatprep.mubr.bf16.mxu0 0
      %936 = vmatmul.mubr.bf16.gmra.mxu0 %v841
      %v937 = vpop.f32.mrf.mxu0
      %v938 = vadd.f32 %v829, %v937
      %v939 = vpop.f32.mrf.mxu0
      %v940 = vpop.f32.mrf.mxu0
      %v941 = vadd.f32 %v829, %v940
      %v942 = vpop.f32.mrf.mxu0
      %943 = vmatprep.mubr.bf16.mxu0 0
      %944 = vmatmul.mubr.bf16.gmra.mxu0 %v844
      %v945 = vpop.f32.mrf.mxu0
      %v946 = vadd.f32 %v829, %v945
      %v947 = vpop.f32.mrf.mxu0
      %v948 = vpop.f32.mrf.mxu0
      %v949 = vadd.f32 %v829, %v948
      %v950 = vpop.f32.mrf.mxu0
      %951 = vmatprep.mubr.bf16.mxu0 0
      %952 = vmatmul.mubr.bf16.gmra.mxu0 %v847
      %v953 = vpop.f32.mrf.mxu0
      %v954 = vadd.f32 %v829, %v953
      %v955 = vpop.f32.mrf.mxu0
      %v956 = vpop.f32.mrf.mxu0
      %v957 = vadd.f32 %v829, %v956
      %v958 = vpop.f32.mrf.mxu0
      %959 = vmatprep.mubr.bf16.mxu0 0
      %960 = vmatmul.mubr.bf16.gmra.mxu0 %v850
      %v961 = vpop.f32.mrf.mxu0
      %v962 = vadd.f32 %v829, %v961
      %v963 = vpop.f32.mrf.mxu0
      %v964 = vpop.f32.mrf.mxu0
      %v965 = vadd.f32 %v829, %v964
      %v966 = vpop.f32.mrf.mxu0
      %967 = vmatprep.mubr.bf16.mxu0 0
      %968 = vmatmul.mubr.bf16.gmra.mxu0 %v853
      %v969 = vpop.f32.mrf.mxu0
      %v970 = vadd.f32 %v829, %v969
      %v971 = vpop.f32.mrf.mxu0
      %v972 = vpop.f32.mrf.mxu0
      %v973 = vadd.f32 %v829, %v972
      %v974 = vpop.f32.mrf.mxu0
      %975 = vmatprep.mubr.bf16.mxu0 0
      %976 = vmatmul.mubr.bf16.gmra.mxu0 %v856
      %v977 = vpop.f32.mrf.mxu0
      %v978 = vadd.f32 %v829, %v977
      %v979 = vpop.f32.mrf.mxu0
      %v980 = vpop.f32.mrf.mxu0
      %v981 = vadd.f32 %v829, %v980
      %v982 = vpop.f32.mrf.mxu0
      %983 = vmatprep.mubr.bf16.mxu0 0
      %984 = vmatmul.mubr.bf16.gmra.mxu0 %v859
      %v985 = vpop.f32.mrf.mxu0
      %v986 = vadd.f32 %v829, %v985
      %v987 = vpop.f32.mrf.mxu0
      %v988 = vpop.f32.mrf.mxu0
      %v989 = vadd.f32 %v829, %v988
      %v990 = vpop.f32.mrf.mxu0
      %991 = vmatprep.mubr.bf16.mxu0 0
      %992 = vmatmul.mubr.bf16.gmra.mxu0 %v862
      %v993 = vpop.f32.mrf.mxu0
      %v994 = vadd.f32 %v829, %v993
      %v995 = vpop.f32.mrf.mxu0
      %v996 = vpop.f32.mrf.mxu0
      %v997 = vadd.f32 %v829, %v996
      %v998 = vpop.f32.mrf.mxu0
      %999 = vmatprep.mubr.bf16.mxu0 0
      %1000 = vmatmul.mubr.bf16.gmra.mxu0 %v865
      %v1001 = vpop.f32.mrf.mxu0
      %v1002 = vadd.f32 %v829, %v1001
      %v1003 = vpop.f32.mrf.mxu0
      %v1004 = vpop.f32.mrf.mxu0
      %v1005 = vadd.f32 %v829, %v1004
      %v1006 = vpop.f32.mrf.mxu0
      %1007 = vmatprep.mubr.bf16.mxu0 0
      %1008 = vmatmul.mubr.bf16.gmra.mxu0 %v868
      %v1009 = vpop.f32.mrf.mxu0
      %v1010 = vadd.f32 %v829, %v1009
      %v1011 = vpop.f32.mrf.mxu0
      %v1012 = vpop.f32.mrf.mxu0
      %v1013 = vadd.f32 %v829, %v1012
      %v1014 = vpop.f32.mrf.mxu0
      %1015 = vmatprep.mubr.bf16.mxu0 0
      %1016 = vmatmul.mubr.bf16.gmra.mxu0 %v871
      %v1017 = vpop.f32.mrf.mxu0
      %v1018 = vadd.f32 %v829, %v1017
      %v1019 = vpop.f32.mrf.mxu0
      %v1020 = vpop.f32.mrf.mxu0
      %v1021 = vadd.f32 %v829, %v1020
      %v1022 = vpop.f32.mrf.mxu0
      %1023 = vmatprep.mubr.bf16.mxu0 0
      %1024 = vmatmul.mubr.bf16.gmra.mxu0 %v874
      %v1025 = vpop.f32.mrf.mxu0
      %v1026 = vadd.f32 %v829, %v1025
      %v1027 = vpop.f32.mrf.mxu0
      %v1028 = vpop.f32.mrf.mxu0
      %v1029 = vadd.f32 %v829, %v1028
      %v1030 = vpop.f32.mrf.mxu0
      %1031 = vmatprep.mubr.bf16.mxu0 0
      %1032 = vmatmul.mubr.bf16.gmra.mxu0 %v877
      %v1033 = vpop.f32.mrf.mxu0
      %v1034 = vadd.f32 %v829, %v1033
      %v1035 = vpop.f32.mrf.mxu0
      %v1036 = vpop.f32.mrf.mxu0
      %v1037 = vadd.f32 %v829, %v1036
      %v1038 = vpop.f32.mrf.mxu0
      %1039 = vdwg.mxu0
      %v1040 = vmul.f32 %v914, 0.5
      %v1041 = vmul.f32 %v917, 0.5
      %v1042 = vmul.f32 %v922, 0.5
      %v1043 = vmul.f32 %v925, 0.5
      %v1044 = vmul.f32 %v930, 0.5
      %v1045 = vmul.f32 %v933, 0.5
      %v1046 = vmul.f32 %v938, 0.5
      %v1047 = vmul.f32 %v941, 0.5
      %v1048 = vmul.f32 %v946, 0.5
      %v1049 = vmul.f32 %v949, 0.5
      %v1050 = vmul.f32 %v954, 0.5
      %v1051 = vmul.f32 %v957, 0.5
      %v1052 = vmul.f32 %v962, 0.5
      %v1053 = vmul.f32 %v965, 0.5
      %v1054 = vmul.f32 %v970, 0.5
      %v1055 = vmul.f32 %v973, 0.5
      %v1056 = vmul.f32 %v978, 0.5
      %v1057 = vmul.f32 %v981, 0.5
      %v1058 = vmul.f32 %v986, 0.5
      %v1059 = vmul.f32 %v989, 0.5
      %v1060 = vmul.f32 %v994, 0.5
      %v1061 = vmul.f32 %v997, 0.5
      %v1062 = vmul.f32 %v1002, 0.5
      %v1063 = vmul.f32 %v1005, 0.5
      %v1064 = vmul.f32 %v1010, 0.5
      %v1065 = vmul.f32 %v1013, 0.5
      %v1066 = vmul.f32 %v1018, 0.5
      %v1067 = vmul.f32 %v1021, 0.5
      %v1068 = vmul.f32 %v1026, 0.5
      %v1069 = vmul.f32 %v1029, 0.5
      %v1070 = vmul.f32 %v1034, 0.5
      %v1071 = vmul.f32 %v1037, 0.5
      %v1072 = vmul.f32 %v1040, 1.442695
      %v1073 = vpow.pop %v1072
      %v1074 = vmul.f32 %v1041, 1.442695
      %v1075 = vpow.pop %v1074
      %v1076 = vmul.f32 %v1042, 1.442695
      %v1077 = vpow.pop %v1076
      %v1078 = vmul.f32 %v1043, 1.442695
      %v1079 = vpow.pop %v1078
      %v1080 = vmul.f32 %v1044, 1.442695
      %v1081 = vpow.pop %v1080
      %v1082 = vmul.f32 %v1045, 1.442695
      %v1083 = vpow.pop %v1082
      %v1084 = vmul.f32 %v1046, 1.442695
      %v1085 = vpow.pop %v1084
      %v1086 = vmul.f32 %v1047, 1.442695
      %v1087 = vpow.pop %v1086
      %v1088 = vmul.f32 %v1048, 1.442695
      %v1089 = vpow.pop %v1088
      %v1090 = vmul.f32 %v1049, 1.442695
      %v1091 = vpow.pop %v1090
      %v1092 = vmul.f32 %v1050, 1.442695
      %v1093 = vpow.pop %v1092
      %v1094 = vmul.f32 %v1051, 1.442695
      %v1095 = vpow.pop %v1094
      %v1096 = vmul.f32 %v1052, 1.442695
      %v1097 = vpow.pop %v1096
      %v1098 = vmul.f32 %v1053, 1.442695
      %v1099 = vpow.pop %v1098
      %v1100 = vmul.f32 %v1054, 1.442695
      %v1101 = vpow.pop %v1100
      %v1102 = vmul.f32 %v1055, 1.442695
      %v1103 = vpow.pop %v1102
      %v1104 = vmul.f32 %v1056, 1.442695
      %v1105 = vpow.pop %v1104
      %v1106 = vmul.f32 %v1057, 1.442695
      %v1107 = vpow.pop %v1106
      %v1108 = vmul.f32 %v1058, 1.442695
      %v1109 = vpow.pop %v1108
      %v1110 = vmul.f32 %v1059, 1.442695
      %v1111 = vpow.pop %v1110
      %v1112 = vmul.f32 %v1060, 1.442695
      %v1113 = vpow.pop %v1112
      %v1114 = vmul.f32 %v1061, 1.442695
      %v1115 = vpow.pop %v1114
      %v1116 = vmul.f32 %v1062, 1.442695
      %v1117 = vpow.pop %v1116
      %v1118 = vmul.f32 %v1063, 1.442695
      %v1119 = vpow.pop %v1118
      %v1120 = vmul.f32 %v1064, 1.442695
      %v1121 = vpow.pop %v1120
      %v1122 = vmul.f32 %v1065, 1.442695
      %v1123 = vpow.pop %v1122
      %v1124 = vmul.f32 %v1066, 1.442695
      %v1125 = vpow.pop %v1124
      %v1126 = vmul.f32 %v1067, 1.442695
      %v1127 = vpow.pop %v1126
      %v1128 = vmul.f32 %v1068, 1.442695
      %v1129 = vpow.pop %v1128
      %v1130 = vmul.f32 %v1069, 1.442695
      %v1131 = vpow.pop %v1130
      %v1132 = vmul.f32 %v1070, 1.442695
      %v1133 = vpow.pop %v1132
      %v1134 = vmul.f32 %v1071, 1.442695
      %v1135 = vpow.pop %v1134
      %v1136 = vmul.f32 %v1073, %v1073
      %v1137 = vmul.f32 %v1075, %v1075
      %v1138 = vmul.f32 %v1077, %v1077
      %v1139 = vmul.f32 %v1079, %v1079
      %v1140 = vmul.f32 %v1081, %v1081
      %v1141 = vmul.f32 %v1083, %v1083
      %v1142 = vmul.f32 %v1085, %v1085
      %v1143 = vmul.f32 %v1087, %v1087
      %v1144 = vmul.f32 %v1089, %v1089
      %v1145 = vmul.f32 %v1091, %v1091
      %v1146 = vmul.f32 %v1093, %v1093
      %v1147 = vmul.f32 %v1095, %v1095
      %v1148 = vmul.f32 %v1097, %v1097
      %v1149 = vmul.f32 %v1099, %v1099
      %v1150 = vmul.f32 %v1101, %v1101
      %v1151 = vmul.f32 %v1103, %v1103
      %v1152 = vmul.f32 %v1105, %v1105
      %v1153 = vmul.f32 %v1107, %v1107
      %v1154 = vmul.f32 %v1109, %v1109
      %v1155 = vmul.f32 %v1111, %v1111
      %v1156 = vmul.f32 %v1113, %v1113
      %v1157 = vmul.f32 %v1115, %v1115
      %v1158 = vmul.f32 %v1117, %v1117
      %v1159 = vmul.f32 %v1119, %v1119
      %v1160 = vmul.f32 %v1121, %v1121
      %v1161 = vmul.f32 %v1123, %v1123
      %v1162 = vmul.f32 %v1125, %v1125
      %v1163 = vmul.f32 %v1127, %v1127
      %v1164 = vmul.f32 %v1129, %v1129
      %v1165 = vmul.f32 %v1131, %v1131
      %v1166 = vmul.f32 %v1133, %v1133
      %v1167 = vmul.f32 %v1135, %v1135
      %1200 = vrot.lane.b32.xlu0 %v148, 108
      %v1201 = vpop.permute.xlu0 %1200
      %1202 = vrot.lane.b32.xlu0 %v149, 108
      %v1203 = vpop.permute.xlu0 %1202
      %1204 = vrot.lane.b32.xlu0 %v150, 108
      %v1205 = vpop.permute.xlu0 %1204
      %1206 = vrot.lane.b32.xlu0 %v151, 108
      %v1207 = vpop.permute.xlu0 %1206
      %1208 = vrot.lane.b32.xlu0 %v152, 108
      %v1209 = vpop.permute.xlu0 %1208
      %1210 = vrot.lane.b32.xlu0 %v153, 108
      %v1211 = vpop.permute.xlu0 %1210
      %1212 = vrot.lane.b32.xlu0 %v154, 108
      %v1213 = vpop.permute.xlu0 %1212
      %1214 = vrot.lane.b32.xlu0 %v155, 108
      %v1215 = vpop.permute.xlu0 %1214
      %1216 = vrot.lane.b32.xlu0 %v156, 108
      %v1217 = vpop.permute.xlu0 %1216
      %1218 = vrot.lane.b32.xlu0 %v157, 108
      %v1219 = vpop.permute.xlu0 %1218
      %1220 = vrot.lane.b32.xlu0 %v158, 108
      %v1221 = vpop.permute.xlu0 %1220
      %1222 = vrot.lane.b32.xlu0 %v159, 108
      %v1223 = vpop.permute.xlu0 %1222
      %1224 = vrot.lane.b32.xlu0 %v160, 108
      %v1225 = vpop.permute.xlu0 %1224
      %1226 = vrot.lane.b32.xlu0 %v161, 108
      %v1227 = vpop.permute.xlu0 %1226
      %1228 = vrot.lane.b32.xlu0 %v162, 108
      %v1229 = vpop.permute.xlu0 %1228
      %1230 = vrot.lane.b32.xlu0 %v163, 108
      %v1231 = vpop.permute.xlu0 %1230
      %1232 = vrot.lane.b32.xlu0 %v164, 108
      %v1233 = vpop.permute.xlu0 %1232
      %1234 = vrot.lane.b32.xlu0 %v165, 108
      %v1235 = vpop.permute.xlu0 %1234
      %1236 = vrot.lane.b32.xlu0 %v166, 108
      %v1237 = vpop.permute.xlu0 %1236
      %1238 = vrot.lane.b32.xlu0 %v167, 108
      %v1239 = vpop.permute.xlu0 %1238
      %1240 = vrot.lane.b32.xlu0 %v168, 108
      %v1241 = vpop.permute.xlu0 %1240
      %1242 = vrot.lane.b32.xlu0 %v169, 108
      %v1243 = vpop.permute.xlu0 %1242
      %1244 = vrot.lane.b32.xlu0 %v170, 108
      %v1245 = vpop.permute.xlu0 %1244
      %1246 = vrot.lane.b32.xlu0 %v171, 108
      %v1247 = vpop.permute.xlu0 %1246
      %1248 = vrot.lane.b32.xlu0 %v172, 108
      %v1249 = vpop.permute.xlu0 %1248
      %1250 = vrot.lane.b32.xlu0 %v173, 108
      %v1251 = vpop.permute.xlu0 %1250
      %1252 = vrot.lane.b32.xlu0 %v174, 108
      %v1253 = vpop.permute.xlu0 %1252
      %1254 = vrot.lane.b32.xlu0 %v175, 108
      %v1255 = vpop.permute.xlu0 %1254
      %1256 = vrot.lane.b32.xlu0 %v176, 108
      %v1257 = vpop.permute.xlu0 %1256
      %1258 = vrot.lane.b32.xlu0 %v177, 108
      %v1259 = vpop.permute.xlu0 %1258
      %1260 = vrot.lane.b32.xlu0 %v178, 108
      %v1261 = vpop.permute.xlu0 %1260
      %1262 = vrot.lane.b32.xlu0 %v179, 108
      %v1263 = vpop.permute.xlu0 %1262
      %v1296 = vmul.f32 %v1073, %v1201
      %v1297 = vmul.f32 %v1075, %v1203
      %v1298 = vmul.f32 %v1077, %v1205
      %v1299 = vmul.f32 %v1079, %v1207
      %v1300 = vmul.f32 %v1081, %v1209
      %v1301 = vmul.f32 %v1083, %v1211
      %v1302 = vmul.f32 %v1085, %v1213
      %v1303 = vmul.f32 %v1087, %v1215
      %v1304 = vmul.f32 %v1089, %v1217
      %v1305 = vmul.f32 %v1091, %v1219
      %v1306 = vmul.f32 %v1093, %v1221
      %v1307 = vmul.f32 %v1095, %v1223
      %v1308 = vmul.f32 %v1097, %v1225
      %v1309 = vmul.f32 %v1099, %v1227
      %v1310 = vmul.f32 %v1101, %v1229
      %v1311 = vmul.f32 %v1103, %v1231
      %v1312 = vmul.f32 %v1105, %v1233
      %v1313 = vmul.f32 %v1107, %v1235
      %v1314 = vmul.f32 %v1109, %v1237
      %v1315 = vmul.f32 %v1111, %v1239
      %v1316 = vmul.f32 %v1113, %v1241
      %v1317 = vmul.f32 %v1115, %v1243
      %v1318 = vmul.f32 %v1117, %v1245
      %v1319 = vmul.f32 %v1119, %v1247
      %v1320 = vmul.f32 %v1121, %v1249
      %v1321 = vmul.f32 %v1123, %v1251
      %v1322 = vmul.f32 %v1125, %v1253
      %v1323 = vmul.f32 %v1127, %v1255
      %v1324 = vmul.f32 %v1129, %v1257
      %v1325 = vmul.f32 %v1131, %v1259
      %v1326 = vmul.f32 %v1133, %v1261
      %v1327 = vmul.f32 %v1135, %v1263
      %1360 = vrot.lane.b32.xlu0 %v914, 4
      %v1361 = vpop.permute.xlu0 %1360
      %1362 = vrot.lane.b32.xlu0 %v917, 4
      %v1363 = vpop.permute.xlu0 %1362
      %1364 = vrot.lane.b32.xlu0 %v922, 4
      %v1365 = vpop.permute.xlu0 %1364
      %1366 = vrot.lane.b32.xlu0 %v925, 4
      %v1367 = vpop.permute.xlu0 %1366
      %1368 = vrot.lane.b32.xlu0 %v930, 4
      %v1369 = vpop.permute.xlu0 %1368
      %1370 = vrot.lane.b32.xlu0 %v933, 4
      %v1371 = vpop.permute.xlu0 %1370
      %1372 = vrot.lane.b32.xlu0 %v938, 4
      %v1373 = vpop.permute.xlu0 %1372
      %1374 = vrot.lane.b32.xlu0 %v941, 4
      %v1375 = vpop.permute.xlu0 %1374
      %1376 = vrot.lane.b32.xlu0 %v946, 4
      %v1377 = vpop.permute.xlu0 %1376
      %1378 = vrot.lane.b32.xlu0 %v949, 4
      %v1379 = vpop.permute.xlu0 %1378
      %1380 = vrot.lane.b32.xlu0 %v954, 4
      %v1381 = vpop.permute.xlu0 %1380
      %1382 = vrot.lane.b32.xlu0 %v957, 4
      %v1383 = vpop.permute.xlu0 %1382
      %1384 = vrot.lane.b32.xlu0 %v962, 4
      %v1385 = vpop.permute.xlu0 %1384
      %1386 = vrot.lane.b32.xlu0 %v965, 4
      %v1387 = vpop.permute.xlu0 %1386
      %1388 = vrot.lane.b32.xlu0 %v970, 4
      %v1389 = vpop.permute.xlu0 %1388
      %1390 = vrot.lane.b32.xlu0 %v973, 4
      %v1391 = vpop.permute.xlu0 %1390
      %1392 = vrot.lane.b32.xlu0 %v978, 4
      %v1393 = vpop.permute.xlu0 %1392
      %1394 = vrot.lane.b32.xlu0 %v981, 4
      %v1395 = vpop.permute.xlu0 %1394
      %1396 = vrot.lane.b32.xlu0 %v986, 4
      %v1397 = vpop.permute.xlu0 %1396
      %1398 = vrot.lane.b32.xlu0 %v989, 4
      %v1399 = vpop.permute.xlu0 %1398
      %1400 = vrot.lane.b32.xlu0 %v994, 4
      %v1401 = vpop.permute.xlu0 %1400
      %1402 = vrot.lane.b32.xlu0 %v997, 4
      %v1403 = vpop.permute.xlu0 %1402
      %1404 = vrot.lane.b32.xlu0 %v1002, 4
      %v1405 = vpop.permute.xlu0 %1404
      %1406 = vrot.lane.b32.xlu0 %v1005, 4
      %v1407 = vpop.permute.xlu0 %1406
      %1408 = vrot.lane.b32.xlu0 %v1010, 4
      %v1409 = vpop.permute.xlu0 %1408
      %1410 = vrot.lane.b32.xlu0 %v1013, 4
      %v1411 = vpop.permute.xlu0 %1410
      %1412 = vrot.lane.b32.xlu0 %v1018, 4
      %v1413 = vpop.permute.xlu0 %1412
      %1414 = vrot.lane.b32.xlu0 %v1021, 4
      %v1415 = vpop.permute.xlu0 %1414
      %1416 = vrot.lane.b32.xlu0 %v1026, 4
      %v1417 = vpop.permute.xlu0 %1416
      %1418 = vrot.lane.b32.xlu0 %v1029, 4
      %v1419 = vpop.permute.xlu0 %1418
      %1420 = vrot.lane.b32.xlu0 %v1034, 4
      %v1421 = vpop.permute.xlu0 %1420
      %1422 = vrot.lane.b32.xlu0 %v1037, 4
      %v1423 = vpop.permute.xlu0 %1422
      %v1456 = vadd.f32 %v1296, %v1361
      %v1457 = vadd.f32 %v1297, %v1363
      %v1458 = vadd.f32 %v1298, %v1365
      %v1459 = vadd.f32 %v1299, %v1367
      %v1460 = vadd.f32 %v1300, %v1369
      %v1461 = vadd.f32 %v1301, %v1371
      %v1462 = vadd.f32 %v1302, %v1373
      %v1463 = vadd.f32 %v1303, %v1375
      %v1464 = vadd.f32 %v1304, %v1377
      %v1465 = vadd.f32 %v1305, %v1379
      %v1466 = vadd.f32 %v1306, %v1381
      %v1467 = vadd.f32 %v1307, %v1383
      %v1468 = vadd.f32 %v1308, %v1385
      %v1469 = vadd.f32 %v1309, %v1387
      %v1470 = vadd.f32 %v1310, %v1389
      %v1471 = vadd.f32 %v1311, %v1391
      %v1472 = vadd.f32 %v1312, %v1393
      %v1473 = vadd.f32 %v1313, %v1395
      %v1474 = vadd.f32 %v1314, %v1397
      %v1475 = vadd.f32 %v1315, %v1399
      %v1476 = vadd.f32 %v1316, %v1401
      %v1477 = vadd.f32 %v1317, %v1403
      %v1478 = vadd.f32 %v1318, %v1405
      %v1479 = vadd.f32 %v1319, %v1407
      %v1480 = vadd.f32 %v1320, %v1409
      %v1481 = vadd.f32 %v1321, %v1411
      %v1482 = vadd.f32 %v1322, %v1413
      %v1483 = vadd.f32 %v1323, %v1415
      %v1484 = vadd.f32 %v1324, %v1417
      %v1485 = vadd.f32 %v1325, %v1419
      %v1486 = vadd.f32 %v1326, %v1421
      %v1487 = vadd.f32 %v1327, %v1423
      %v1488 = vld [vmem:[%s1 + $0xd0] sm:$0xf]
      %v1489 = vpack.c.bf16 %v1488, %v1488
      %v1490 = vpack.c.bf16 %v1457, %v1456
      %v1491 = vpack.c.bf16 %v1459, %v1458
      %v1492 = vpack.c.bf16 %v1461, %v1460
      %v1493 = vpack.c.bf16 %v1463, %v1462
      %v1494 = vpack.c.bf16 %v1465, %v1464
      %v1495 = vpack.c.bf16 %v1467, %v1466
      %v1496 = vpack.c.bf16 %v1469, %v1468
      %v1497 = vpack.c.bf16 %v1471, %v1470
      %v1498 = vpack.c.bf16 %v1473, %v1472
      %v1499 = vpack.c.bf16 %v1475, %v1474
      %v1500 = vpack.c.bf16 %v1477, %v1476
      %v1501 = vpack.c.bf16 %v1479, %v1478
      %v1502 = vpack.c.bf16 %v1481, %v1480
      %v1503 = vpack.c.bf16 %v1483, %v1482
      %v1504 = vpack.c.bf16 %v1485, %v1484
      %v1505 = vpack.c.bf16 %v1487, %v1486
      %v1506 = vld [vmem:[%s1 + $0xd8] sm:$0x1]
      %v1507 = vlaneseq
      %v1508 = vshrl.u32 %v1507, 7
      %v1509 = vsub.s32 0, %v1508
      %v1510 = vrot.slane %v1506, %v1509
      %1527 = vrot.lane.b32.xlu0 %v1490, 124
      %v1528 = vpop.permute.xlu0 %1527
      %1529 = vrot.lane.b32.xlu0 %v1491, 124
      %v1530 = vpop.permute.xlu0 %1529
      %1531 = vrot.lane.b32.xlu0 %v1492, 124
      %v1532 = vpop.permute.xlu0 %1531
      %1533 = vrot.lane.b32.xlu0 %v1493, 124
      %v1534 = vpop.permute.xlu0 %1533
      %1535 = vrot.lane.b32.xlu0 %v1494, 124
      %v1536 = vpop.permute.xlu0 %1535
      %1537 = vrot.lane.b32.xlu0 %v1495, 124
      %v1538 = vpop.permute.xlu0 %1537
      %1539 = vrot.lane.b32.xlu0 %v1496, 124
      %v1540 = vpop.permute.xlu0 %1539
      %1541 = vrot.lane.b32.xlu0 %v1497, 124
      %v1542 = vpop.permute.xlu0 %1541
      %1543 = vrot.lane.b32.xlu0 %v1498, 124
      %v1544 = vpop.permute.xlu0 %1543
      %1545 = vrot.lane.b32.xlu0 %v1499, 124
      %v1546 = vpop.permute.xlu0 %1545
      %1547 = vrot.lane.b32.xlu0 %v1500, 124
      %v1548 = vpop.permute.xlu0 %1547
      %1549 = vrot.lane.b32.xlu0 %v1501, 124
      %v1550 = vpop.permute.xlu0 %1549
      %1551 = vrot.lane.b32.xlu0 %v1502, 124
      %v1552 = vpop.permute.xlu0 %1551
      %1553 = vrot.lane.b32.xlu0 %v1503, 124
      %v1554 = vpop.permute.xlu0 %1553
      %1555 = vrot.lane.b32.xlu0 %v1504, 124
      %v1556 = vpop.permute.xlu0 %1555
      %1557 = vrot.lane.b32.xlu0 %v1505, 124
      %v1558 = vpop.permute.xlu0 %1557
      %vm1559 = vcmask 31744
      %v1561 = vsel %vm1559, %v1528, 0
      %v1564 = vsel %vm1559, %v1530, 0
      %v1567 = vsel %vm1559, %v1532, 0
      %v1570 = vsel %vm1559, %v1534, 0
      %v1573 = vsel %vm1559, %v1536, 0
      %v1576 = vsel %vm1559, %v1538, 0
      %v1579 = vsel %vm1559, %v1540, 0
      %v1582 = vsel %vm1559, %v1542, 0
      %v1585 = vsel %vm1559, %v1544, 0
      %v1588 = vsel %vm1559, %v1546, 0
      %v1591 = vsel %vm1559, %v1548, 0
      %v1594 = vsel %vm1559, %v1550, 0
      %v1597 = vsel %vm1559, %v1552, 0
      %v1600 = vsel %vm1559, %v1554, 0
      %v1603 = vsel %vm1559, %v1556, 0
      %v1606 = vsel %vm1559, %v1558, 0
      %vm1608 = vcmask 1041408
      %v1610 = vsel %vm1608, %v1489, 0
      %1612 = vmatprep.subr.bf16.mxu0 0
      %1613 = vmatpush1.bf16.msra.mxu0 0
      %1614 = vmatprep.subr.bf16.mxu0 0
      %1615 = vmatpush1.bf16.msra.mxu0 0
      %1616 = vmatprep.subr.bf16.mxu0 0
      %1617 = vmatpush1.bf16.msra.mxu0 0
      %1618 = vmatprep.subr.bf16.mxu0 0
      %1619 = vmatpush1.bf16.msra.mxu0 0
      %1620 = vmatprep.subr.bf16.mxu0 0
      %1621 = vmatpush1.bf16.msra.mxu0 0
      %1622 = vmatprep.subr.bf16.mxu0 0
      %1623 = vmatpush1.bf16.msra.mxu0 0
      %1624 = vmatprep.subr.bf16.mxu0 0
      %1625 = vmatpush1.bf16.msra.mxu0 0
      %1626 = vmatprep.subr.bf16.mxu0 0
      %1627 = vmatpush1.bf16.msra.mxu0 %v1610
      %1628 = vmatprep.subr.bf16.mxu0 0
      %1629 = vmatpush2.bf16.msra.mxu0 0
      %1630 = vmatprep.subr.bf16.mxu0 0
      %1631 = vmatpush2.bf16.msra.mxu0 0
      %1632 = vmatprep.subr.bf16.mxu0 0
      %1633 = vmatpush2.bf16.msra.mxu0 0
      %1634 = vmatprep.subr.bf16.mxu0 0
      %1635 = vmatpush2.bf16.msra.mxu0 0
      %1636 = vmatprep.subr.bf16.mxu0 0
      %1637 = vmatpush2.bf16.msra.mxu0 0
      %1638 = vmatprep.subr.bf16.mxu0 0
      %1639 = vmatpush2.bf16.msra.mxu0 0
      %1640 = vmatprep.subr.bf16.mxu0 0
      %1641 = vmatpush2.bf16.msra.mxu0 0
      %1642 = vmatprep.subr.bf16.mxu0 0
      %1643 = vmatpush2.bf16.msra.mxu0 0
      %1644 = vmatprep.mubr.bf16.mxu0 0
      %1645 = vmatmul.mubr.bf16.gmra.mxu0 %v1561
      %v1646 = vpop.f32.mrf.mxu0
      %v1647 = vadd.f32 %v1510, %v1646
      %v1648 = vpop.f32.mrf.mxu0
      %v1649 = vpop.f32.mrf.mxu0
      %v1650 = vadd.f32 %v1510, %v1649
      %v1651 = vpop.f32.mrf.mxu0
      %1652 = vmatprep.mubr.bf16.mxu0 0
      %1653 = vmatmul.mubr.bf16.gmra.mxu0 %v1564
      %v1654 = vpop.f32.mrf.mxu0
      %v1655 = vadd.f32 %v1510, %v1654
      %v1656 = vpop.f32.mrf.mxu0
      %v1657 = vpop.f32.mrf.mxu0
      %v1658 = vadd.f32 %v1510, %v1657
      %v1659 = vpop.f32.mrf.mxu0
      %1660 = vmatprep.mubr.bf16.mxu0 0
      %1661 = vmatmul.mubr.bf16.gmra.mxu0 %v1567
      %v1662 = vpop.f32.mrf.mxu0
      %v1663 = vadd.f32 %v1510, %v1662
      %v1664 = vpop.f32.mrf.mxu0
      %v1665 = vpop.f32.mrf.mxu0
      %v1666 = vadd.f32 %v1510, %v1665
      %v1667 = vpop.f32.mrf.mxu0
      %1668 = vmatprep.mubr.bf16.mxu0 0
      %1669 = vmatmul.mubr.bf16.gmra.mxu0 %v1570
      %v1670 = vpop.f32.mrf.mxu0
      %v1671 = vadd.f32 %v1510, %v1670
      %v1672 = vpop.f32.mrf.mxu0
      %v1673 = vpop.f32.mrf.mxu0
      %v1674 = vadd.f32 %v1510, %v1673
      %v1675 = vpop.f32.mrf.mxu0
      %1676 = vmatprep.mubr.bf16.mxu0 0
      %1677 = vmatmul.mubr.bf16.gmra.mxu0 %v1573
      %v1678 = vpop.f32.mrf.mxu0
      %v1679 = vadd.f32 %v1510, %v1678
      %v1680 = vpop.f32.mrf.mxu0
      %v1681 = vpop.f32.mrf.mxu0
      %v1682 = vadd.f32 %v1510, %v1681
      %v1683 = vpop.f32.mrf.mxu0
      %1684 = vmatprep.mubr.bf16.mxu0 0
      %1685 = vmatmul.mubr.bf16.gmra.mxu0 %v1576
      %v1686 = vpop.f32.mrf.mxu0
      %v1687 = vadd.f32 %v1510, %v1686
      %v1688 = vpop.f32.mrf.mxu0
      %v1689 = vpop.f32.mrf.mxu0
      %v1690 = vadd.f32 %v1510, %v1689
      %v1691 = vpop.f32.mrf.mxu0
      %1692 = vmatprep.mubr.bf16.mxu0 0
      %1693 = vmatmul.mubr.bf16.gmra.mxu0 %v1579
      %v1694 = vpop.f32.mrf.mxu0
      %v1695 = vadd.f32 %v1510, %v1694
      %v1696 = vpop.f32.mrf.mxu0
      %v1697 = vpop.f32.mrf.mxu0
      %v1698 = vadd.f32 %v1510, %v1697
      %v1699 = vpop.f32.mrf.mxu0
      %1700 = vmatprep.mubr.bf16.mxu0 0
      %1701 = vmatmul.mubr.bf16.gmra.mxu0 %v1582
      %v1702 = vpop.f32.mrf.mxu0
      %v1703 = vadd.f32 %v1510, %v1702
      %v1704 = vpop.f32.mrf.mxu0
      %v1705 = vpop.f32.mrf.mxu0
      %v1706 = vadd.f32 %v1510, %v1705
      %v1707 = vpop.f32.mrf.mxu0
      %1708 = vmatprep.mubr.bf16.mxu0 0
      %1709 = vmatmul.mubr.bf16.gmra.mxu0 %v1585
      %v1710 = vpop.f32.mrf.mxu0
      %v1711 = vadd.f32 %v1510, %v1710
      %v1712 = vpop.f32.mrf.mxu0
      %v1713 = vpop.f32.mrf.mxu0
      %v1714 = vadd.f32 %v1510, %v1713
      %v1715 = vpop.f32.mrf.mxu0
      %1716 = vmatprep.mubr.bf16.mxu0 0
      %1717 = vmatmul.mubr.bf16.gmra.mxu0 %v1588
      %v1718 = vpop.f32.mrf.mxu0
      %v1719 = vadd.f32 %v1510, %v1718
      %v1720 = vpop.f32.mrf.mxu0
      %v1721 = vpop.f32.mrf.mxu0
      %v1722 = vadd.f32 %v1510, %v1721
      %v1723 = vpop.f32.mrf.mxu0
      %1724 = vmatprep.mubr.bf16.mxu0 0
      %1725 = vmatmul.mubr.bf16.gmra.mxu0 %v1591
      %v1726 = vpop.f32.mrf.mxu0
      %v1727 = vadd.f32 %v1510, %v1726
      %v1728 = vpop.f32.mrf.mxu0
      %v1729 = vpop.f32.mrf.mxu0
      %v1730 = vadd.f32 %v1510, %v1729
      %v1731 = vpop.f32.mrf.mxu0
      %1732 = vmatprep.mubr.bf16.mxu0 0
      %1733 = vmatmul.mubr.bf16.gmra.mxu0 %v1594
      %v1734 = vpop.f32.mrf.mxu0
      %v1735 = vadd.f32 %v1510, %v1734
      %v1736 = vpop.f32.mrf.mxu0
      %v1737 = vpop.f32.mrf.mxu0
      %v1738 = vadd.f32 %v1510, %v1737
      %v1739 = vpop.f32.mrf.mxu0
      %1740 = vmatprep.mubr.bf16.mxu0 0
      %1741 = vmatmul.mubr.bf16.gmra.mxu0 %v1597
      %v1742 = vpop.f32.mrf.mxu0
      %v1743 = vadd.f32 %v1510, %v1742
      %v1744 = vpop.f32.mrf.mxu0
      %v1745 = vpop.f32.mrf.mxu0
      %v1746 = vadd.f32 %v1510, %v1745
      %v1747 = vpop.f32.mrf.mxu0
      %1748 = vmatprep.mubr.bf16.mxu0 0
      %1749 = vmatmul.mubr.bf16.gmra.mxu0 %v1600
      %v1750 = vpop.f32.mrf.mxu0
      %v1751 = vadd.f32 %v1510, %v1750
      %v1752 = vpop.f32.mrf.mxu0
      %v1753 = vpop.f32.mrf.mxu0
      %v1754 = vadd.f32 %v1510, %v1753
      %v1755 = vpop.f32.mrf.mxu0
      %1756 = vmatprep.mubr.bf16.mxu0 0
      %1757 = vmatmul.mubr.bf16.gmra.mxu0 %v1603
      %v1758 = vpop.f32.mrf.mxu0
      %v1759 = vadd.f32 %v1510, %v1758
      %v1760 = vpop.f32.mrf.mxu0
      %v1761 = vpop.f32.mrf.mxu0
      %v1762 = vadd.f32 %v1510, %v1761
      %v1763 = vpop.f32.mrf.mxu0
      %1764 = vmatprep.mubr.bf16.mxu0 0
      %1765 = vmatmul.mubr.bf16.gmra.mxu0 %v1606
      %v1766 = vpop.f32.mrf.mxu0
      %v1767 = vadd.f32 %v1510, %v1766
      %v1768 = vpop.f32.mrf.mxu0
      %v1769 = vpop.f32.mrf.mxu0
      %v1770 = vadd.f32 %v1510, %v1769
      %v1771 = vpop.f32.mrf.mxu0
      %1772 = vdwg.mxu0
      %v1773 = vmax.f32 %v1647, 0.0
      %v1774 = vmax.f32 %v1650, 0.0
      %v1775 = vmax.f32 %v1655, 0.0
      %v1776 = vmax.f32 %v1658, 0.0
      %v1777 = vmax.f32 %v1663, 0.0
      %v1778 = vmax.f32 %v1666, 0.0
      %v1779 = vmax.f32 %v1671, 0.0
      %v1780 = vmax.f32 %v1674, 0.0
      %v1781 = vmax.f32 %v1679, 0.0
      %v1782 = vmax.f32 %v1682, 0.0
      %v1783 = vmax.f32 %v1687, 0.0
      %v1784 = vmax.f32 %v1690, 0.0
      %v1785 = vmax.f32 %v1695, 0.0
      %v1786 = vmax.f32 %v1698, 0.0
      %v1787 = vmax.f32 %v1703, 0.0
      %v1788 = vmax.f32 %v1706, 0.0
      %v1789 = vmax.f32 %v1711, 0.0
      %v1790 = vmax.f32 %v1714, 0.0
      %v1791 = vmax.f32 %v1719, 0.0
      %v1792 = vmax.f32 %v1722, 0.0
      %v1793 = vmax.f32 %v1727, 0.0
      %v1794 = vmax.f32 %v1730, 0.0
      %v1795 = vmax.f32 %v1735, 0.0
      %v1796 = vmax.f32 %v1738, 0.0
      %v1797 = vmax.f32 %v1743, 0.0
      %v1798 = vmax.f32 %v1746, 0.0
      %v1799 = vmax.f32 %v1751, 0.0
      %v1800 = vmax.f32 %v1754, 0.0
      %v1801 = vmax.f32 %v1759, 0.0
      %v1802 = vmax.f32 %v1762, 0.0
      %v1803 = vmax.f32 %v1767, 0.0
      %v1804 = vmax.f32 %v1770, 0.0
      %v1805 = vld [vmem:[%s1 + $0xe0] sm:$0xff]
      %v1806 = vld [vmem:[%s1 + $0xe8] sm:$0xff]
      %v1807 = vld [vmem:[%s1 + $0xf0] sm:$0xff]
      %v1808 = vld [vmem:[%s1 + $0xf8] sm:$0xff]
      %v1809 = vpack.c.bf16 %v1806, %v1805
      %v1810 = vpack.c.bf16 %v1808, %v1807
      %v1811 = vpack.c.bf16 %v1774, %v1773
      %v1812 = vpack.c.bf16 %v1776, %v1775
      %v1813 = vpack.c.bf16 %v1778, %v1777
      %v1814 = vpack.c.bf16 %v1780, %v1779
      %v1815 = vpack.c.bf16 %v1782, %v1781
      %v1816 = vpack.c.bf16 %v1784, %v1783
      %v1817 = vpack.c.bf16 %v1786, %v1785
      %v1818 = vpack.c.bf16 %v1788, %v1787
      %v1819 = vpack.c.bf16 %v1790, %v1789
      %v1820 = vpack.c.bf16 %v1792, %v1791
      %v1821 = vpack.c.bf16 %v1794, %v1793
      %v1822 = vpack.c.bf16 %v1796, %v1795
      %v1823 = vpack.c.bf16 %v1798, %v1797
      %v1824 = vpack.c.bf16 %v1800, %v1799
      %v1825 = vpack.c.bf16 %v1802, %v1801
      %v1826 = vpack.c.bf16 %v1804, %v1803
      %v1827 = vld [vmem:[%s1 + $0x100] sm:$0x1]
      %v1828 = vlaneseq
      %v1829 = vshrl.u32 %v1828, 7
      %v1830 = vsub.s32 0, %v1829
      %v1831 = vrot.slane %v1827, %v1830
      %vm1832 = vcmask 261120
      %v1834 = vsel %vm1832, %v1811, 0
      %v1837 = vsel %vm1832, %v1812, 0
      %v1840 = vsel %vm1832, %v1813, 0
      %v1843 = vsel %vm1832, %v1814, 0
      %v1846 = vsel %vm1832, %v1815, 0
      %v1849 = vsel %vm1832, %v1816, 0
      %v1852 = vsel %vm1832, %v1817, 0
      %v1855 = vsel %vm1832, %v1818, 0
      %v1858 = vsel %vm1832, %v1819, 0
      %v1861 = vsel %vm1832, %v1820, 0
      %v1864 = vsel %vm1832, %v1821, 0
      %v1867 = vsel %vm1832, %v1822, 0
      %v1870 = vsel %vm1832, %v1823, 0
      %v1873 = vsel %vm1832, %v1824, 0
      %v1876 = vsel %vm1832, %v1825, 0
      %v1879 = vsel %vm1832, %v1826, 0
      %1881 = vmatprep.subr.bf16.mxu0 0
      %1882 = vmatpush1.bf16.msra.mxu0 0
      %1883 = vmatprep.subr.bf16.mxu0 0
      %1884 = vmatpush1.bf16.msra.mxu0 0
      %1885 = vmatprep.subr.bf16.mxu0 0
      %1886 = vmatpush1.bf16.msra.mxu0 0
      %1887 = vmatprep.subr.bf16.mxu0 0
      %1888 = vmatpush1.bf16.msra.mxu0 0
      %1889 = vmatprep.subr.bf16.mxu0 0
      %1890 = vmatpush1.bf16.msra.mxu0 0
      %1891 = vmatprep.subr.bf16.mxu0 0
      %1892 = vmatpush1.bf16.msra.mxu0 0
      %1893 = vmatprep.subr.bf16.mxu0 0
      %1894 = vmatpush1.bf16.msra.mxu0 %v1810
      %1895 = vmatprep.subr.bf16.mxu0 0
      %1896 = vmatpush1.bf16.msra.mxu0 %v1809
      %1897 = vmatprep.subr.bf16.mxu0 0
      %1898 = vmatpush2.bf16.msra.mxu0 0
      %1899 = vmatprep.subr.bf16.mxu0 0
      %1900 = vmatpush2.bf16.msra.mxu0 0
      %1901 = vmatprep.subr.bf16.mxu0 0
      %1902 = vmatpush2.bf16.msra.mxu0 0
      %1903 = vmatprep.subr.bf16.mxu0 0
      %1904 = vmatpush2.bf16.msra.mxu0 0
      %1905 = vmatprep.subr.bf16.mxu0 0
      %1906 = vmatpush2.bf16.msra.mxu0 0
      %1907 = vmatprep.subr.bf16.mxu0 0
      %1908 = vmatpush2.bf16.msra.mxu0 0
      %1909 = vmatprep.subr.bf16.mxu0 0
      %1910 = vmatpush2.bf16.msra.mxu0 0
      %1911 = vmatprep.subr.bf16.mxu0 0
      %1912 = vmatpush2.bf16.msra.mxu0 0
      %1913 = vmatprep.mubr.bf16.mxu0 0
      %1914 = vmatmul.mubr.bf16.gmra.mxu0 %v1834
      %v1915 = vpop.f32.mrf.mxu0
      %v1916 = vadd.f32 %v1831, %v1915
      %v1917 = vpop.f32.mrf.mxu0
      %v1918 = vpop.f32.mrf.mxu0
      %v1919 = vadd.f32 %v1831, %v1918
      %v1920 = vpop.f32.mrf.mxu0
      %1921 = vmatprep.mubr.bf16.mxu0 0
      %1922 = vmatmul.mubr.bf16.gmra.mxu0 %v1837
      %v1923 = vpop.f32.mrf.mxu0
      %v1924 = vadd.f32 %v1831, %v1923
      %v1925 = vpop.f32.mrf.mxu0
      %v1926 = vpop.f32.mrf.mxu0
      %v1927 = vadd.f32 %v1831, %v1926
      %v1928 = vpop.f32.mrf.mxu0
      %1929 = vmatprep.mubr.bf16.mxu0 0
      %1930 = vmatmul.mubr.bf16.gmra.mxu0 %v1840
      %v1931 = vpop.f32.mrf.mxu0
      %v1932 = vadd.f32 %v1831, %v1931
      %v1933 = vpop.f32.mrf.mxu0
      %v1934 = vpop.f32.mrf.mxu0
      %v1935 = vadd.f32 %v1831, %v1934
      %v1936 = vpop.f32.mrf.mxu0
      %1937 = vmatprep.mubr.bf16.mxu0 0
      %1938 = vmatmul.mubr.bf16.gmra.mxu0 %v1843
      %v1939 = vpop.f32.mrf.mxu0
      %v1940 = vadd.f32 %v1831, %v1939
      %v1941 = vpop.f32.mrf.mxu0
      %v1942 = vpop.f32.mrf.mxu0
      %v1943 = vadd.f32 %v1831, %v1942
      %v1944 = vpop.f32.mrf.mxu0
      %1945 = vmatprep.mubr.bf16.mxu0 0
      %1946 = vmatmul.mubr.bf16.gmra.mxu0 %v1846
      %v1947 = vpop.f32.mrf.mxu0
      %v1948 = vadd.f32 %v1831, %v1947
      %v1949 = vpop.f32.mrf.mxu0
      %v1950 = vpop.f32.mrf.mxu0
      %v1951 = vadd.f32 %v1831, %v1950
      %v1952 = vpop.f32.mrf.mxu0
      %1953 = vmatprep.mubr.bf16.mxu0 0
      %1954 = vmatmul.mubr.bf16.gmra.mxu0 %v1849
      %v1955 = vpop.f32.mrf.mxu0
      %v1956 = vadd.f32 %v1831, %v1955
      %v1957 = vpop.f32.mrf.mxu0
      %v1958 = vpop.f32.mrf.mxu0
      %v1959 = vadd.f32 %v1831, %v1958
      %v1960 = vpop.f32.mrf.mxu0
      %1961 = vmatprep.mubr.bf16.mxu0 0
      %1962 = vmatmul.mubr.bf16.gmra.mxu0 %v1852
      %v1963 = vpop.f32.mrf.mxu0
      %v1964 = vadd.f32 %v1831, %v1963
      %v1965 = vpop.f32.mrf.mxu0
      %v1966 = vpop.f32.mrf.mxu0
      %v1967 = vadd.f32 %v1831, %v1966
      %v1968 = vpop.f32.mrf.mxu0
      %1969 = vmatprep.mubr.bf16.mxu0 0
      %1970 = vmatmul.mubr.bf16.gmra.mxu0 %v1855
      %v1971 = vpop.f32.mrf.mxu0
      %v1972 = vadd.f32 %v1831, %v1971
      %v1973 = vpop.f32.mrf.mxu0
      %v1974 = vpop.f32.mrf.mxu0
      %v1975 = vadd.f32 %v1831, %v1974
      %v1976 = vpop.f32.mrf.mxu0
      %1977 = vmatprep.mubr.bf16.mxu0 0
      %1978 = vmatmul.mubr.bf16.gmra.mxu0 %v1858
      %v1979 = vpop.f32.mrf.mxu0
      %v1980 = vadd.f32 %v1831, %v1979
      %v1981 = vpop.f32.mrf.mxu0
      %v1982 = vpop.f32.mrf.mxu0
      %v1983 = vadd.f32 %v1831, %v1982
      %v1984 = vpop.f32.mrf.mxu0
      %1985 = vmatprep.mubr.bf16.mxu0 0
      %1986 = vmatmul.mubr.bf16.gmra.mxu0 %v1861
      %v1987 = vpop.f32.mrf.mxu0
      %v1988 = vadd.f32 %v1831, %v1987
      %v1989 = vpop.f32.mrf.mxu0
      %v1990 = vpop.f32.mrf.mxu0
      %v1991 = vadd.f32 %v1831, %v1990
      %v1992 = vpop.f32.mrf.mxu0
      %1993 = vmatprep.mubr.bf16.mxu0 0
      %1994 = vmatmul.mubr.bf16.gmra.mxu0 %v1864
      %v1995 = vpop.f32.mrf.mxu0
      %v1996 = vadd.f32 %v1831, %v1995
      %v1997 = vpop.f32.mrf.mxu0
      %v1998 = vpop.f32.mrf.mxu0
      %v1999 = vadd.f32 %v1831, %v1998
      %v2000 = vpop.f32.mrf.mxu0
      %2001 = vmatprep.mubr.bf16.mxu0 0
      %2002 = vmatmul.mubr.bf16.gmra.mxu0 %v1867
      %v2003 = vpop.f32.mrf.mxu0
      %v2004 = vadd.f32 %v1831, %v2003
      %v2005 = vpop.f32.mrf.mxu0
      %v2006 = vpop.f32.mrf.mxu0
      %v2007 = vadd.f32 %v1831, %v2006
      %v2008 = vpop.f32.mrf.mxu0
      %2009 = vmatprep.mubr.bf16.mxu0 0
      %2010 = vmatmul.mubr.bf16.gmra.mxu0 %v1870
      %v2011 = vpop.f32.mrf.mxu0
      %v2012 = vadd.f32 %v1831, %v2011
      %v2013 = vpop.f32.mrf.mxu0
      %v2014 = vpop.f32.mrf.mxu0
      %v2015 = vadd.f32 %v1831, %v2014
      %v2016 = vpop.f32.mrf.mxu0
      %2017 = vmatprep.mubr.bf16.mxu0 0
      %2018 = vmatmul.mubr.bf16.gmra.mxu0 %v1873
      %v2019 = vpop.f32.mrf.mxu0
      %v2020 = vadd.f32 %v1831, %v2019
      %v2021 = vpop.f32.mrf.mxu0
      %v2022 = vpop.f32.mrf.mxu0
      %v2023 = vadd.f32 %v1831, %v2022
      %v2024 = vpop.f32.mrf.mxu0
      %2025 = vmatprep.mubr.bf16.mxu0 0
      %2026 = vmatmul.mubr.bf16.gmra.mxu0 %v1876
      %v2027 = vpop.f32.mrf.mxu0
      %v2028 = vadd.f32 %v1831, %v2027
      %v2029 = vpop.f32.mrf.mxu0
      %v2030 = vpop.f32.mrf.mxu0
      %v2031 = vadd.f32 %v1831, %v2030
      %v2032 = vpop.f32.mrf.mxu0
      %2033 = vmatprep.mubr.bf16.mxu0 0
      %2034 = vmatmul.mubr.bf16.gmra.mxu0 %v1879
      %v2035 = vpop.f32.mrf.mxu0
      %v2036 = vadd.f32 %v1831, %v2035
      %v2037 = vpop.f32.mrf.mxu0
      %v2038 = vpop.f32.mrf.mxu0
      %v2039 = vadd.f32 %v1831, %v2038
      %v2040 = vpop.f32.mrf.mxu0
      %2041 = vdwg.mxu0
      %v2042 = vmax.f32 %v1916, 0.0
      %v2043 = vmax.f32 %v1919, 0.0
      %v2044 = vmax.f32 %v1924, 0.0
      %v2045 = vmax.f32 %v1927, 0.0
      %v2046 = vmax.f32 %v1932, 0.0
      %v2047 = vmax.f32 %v1935, 0.0
      %v2048 = vmax.f32 %v1940, 0.0
      %v2049 = vmax.f32 %v1943, 0.0
      %v2050 = vmax.f32 %v1948, 0.0
      %v2051 = vmax.f32 %v1951, 0.0
      %v2052 = vmax.f32 %v1956, 0.0
      %v2053 = vmax.f32 %v1959, 0.0
      %v2054 = vmax.f32 %v1964, 0.0
      %v2055 = vmax.f32 %v1967, 0.0
      %v2056 = vmax.f32 %v1972, 0.0
      %v2057 = vmax.f32 %v1975, 0.0
      %v2058 = vmax.f32 %v1980, 0.0
      %v2059 = vmax.f32 %v1983, 0.0
      %v2060 = vmax.f32 %v1988, 0.0
      %v2061 = vmax.f32 %v1991, 0.0
      %v2062 = vmax.f32 %v1996, 0.0
      %v2063 = vmax.f32 %v1999, 0.0
      %v2064 = vmax.f32 %v2004, 0.0
      %v2065 = vmax.f32 %v2007, 0.0
      %v2066 = vmax.f32 %v2012, 0.0
      %v2067 = vmax.f32 %v2015, 0.0
      %v2068 = vmax.f32 %v2020, 0.0
      %v2069 = vmax.f32 %v2023, 0.0
      %v2070 = vmax.f32 %v2028, 0.0
      %v2071 = vmax.f32 %v2031, 0.0
      %v2072 = vmax.f32 %v2036, 0.0
      %v2073 = vmax.f32 %v2039, 0.0
      %v2074 = vld [vmem:[%s1 + $0x108] sm:$0xff]
      %v2075 = vld [vmem:[%s1 + $0x110] sm:$0xff]
      %v2076 = vld [vmem:[%s1 + $0x118] sm:$0xff]
      %v2077 = vld [vmem:[%s1 + $0x120] sm:$0xff]
      %v2078 = vpack.c.bf16 %v2075, %v2074
      %v2079 = vpack.c.bf16 %v2077, %v2076
      %v2080 = vpack.c.bf16 %v2043, %v2042
      %v2081 = vpack.c.bf16 %v2045, %v2044
      %v2082 = vpack.c.bf16 %v2047, %v2046
      %v2083 = vpack.c.bf16 %v2049, %v2048
      %v2084 = vpack.c.bf16 %v2051, %v2050
      %v2085 = vpack.c.bf16 %v2053, %v2052
      %v2086 = vpack.c.bf16 %v2055, %v2054
      %v2087 = vpack.c.bf16 %v2057, %v2056
      %v2088 = vpack.c.bf16 %v2059, %v2058
      %v2089 = vpack.c.bf16 %v2061, %v2060
      %v2090 = vpack.c.bf16 %v2063, %v2062
      %v2091 = vpack.c.bf16 %v2065, %v2064
      %v2092 = vpack.c.bf16 %v2067, %v2066
      %v2093 = vpack.c.bf16 %v2069, %v2068
      %v2094 = vpack.c.bf16 %v2071, %v2070
      %v2095 = vpack.c.bf16 %v2073, %v2072
      %v2096 = vld [vmem:[%s1 + $0x128] sm:$0x1]
      %v2097 = vlaneseq
      %v2098 = vshrl.u32 %v2097, 7
      %v2099 = vsub.s32 0, %v2098
      %v2100 = vrot.slane %v2096, %v2099
      %v2102 = vsel %vm1832, %v2080, 0
      %v2105 = vsel %vm1832, %v2081, 0
      %v2108 = vsel %vm1832, %v2082, 0
      %v2111 = vsel %vm1832, %v2083, 0
      %v2114 = vsel %vm1832, %v2084, 0
      %v2117 = vsel %vm1832, %v2085, 0
      %v2120 = vsel %vm1832, %v2086, 0
      %v2123 = vsel %vm1832, %v2087, 0
      %v2126 = vsel %vm1832, %v2088, 0
      %v2129 = vsel %vm1832, %v2089, 0
      %v2132 = vsel %vm1832, %v2090, 0
      %v2135 = vsel %vm1832, %v2091, 0
      %v2138 = vsel %vm1832, %v2092, 0
      %v2141 = vsel %vm1832, %v2093, 0
      %v2144 = vsel %vm1832, %v2094, 0
      %v2147 = vsel %vm1832, %v2095, 0
      %2149 = vmatprep.subr.bf16.mxu0 0
      %2150 = vmatpush1.bf16.msra.mxu0 0
      %2151 = vmatprep.subr.bf16.mxu0 0
      %2152 = vmatpush1.bf16.msra.mxu0 0
      %2153 = vmatprep.subr.bf16.mxu0 0
      %2154 = vmatpush1.bf16.msra.mxu0 0
      %2155 = vmatprep.subr.bf16.mxu0 0
      %2156 = vmatpush1.bf16.msra.mxu0 0
      %2157 = vmatprep.subr.bf16.mxu0 0
      %2158 = vmatpush1.bf16.msra.mxu0 0
      %2159 = vmatprep.subr.bf16.mxu0 0
      %2160 = vmatpush1.bf16.msra.mxu0 0
      %2161 = vmatprep.subr.bf16.mxu0 0
      %2162 = vmatpush1.bf16.msra.mxu0 %v2079
      %2163 = vmatprep.subr.bf16.mxu0 0
      %2164 = vmatpush1.bf16.msra.mxu0 %v2078
      %2165 = vmatprep.subr.bf16.mxu0 0
      %2166 = vmatpush2.bf16.msra.mxu0 0
      %2167 = vmatprep.subr.bf16.mxu0 0
      %2168 = vmatpush2.bf16.msra.mxu0 0
      %2169 = vmatprep.subr.bf16.mxu0 0
      %2170 = vmatpush2.bf16.msra.mxu0 0
      %2171 = vmatprep.subr.bf16.mxu0 0
      %2172 = vmatpush2.bf16.msra.mxu0 0
      %2173 = vmatprep.subr.bf16.mxu0 0
      %2174 = vmatpush2.bf16.msra.mxu0 0
      %2175 = vmatprep.subr.bf16.mxu0 0
      %2176 = vmatpush2.bf16.msra.mxu0 0
      %2177 = vmatprep.subr.bf16.mxu0 0
      %2178 = vmatpush2.bf16.msra.mxu0 0
      %2179 = vmatprep.subr.bf16.mxu0 0
      %2180 = vmatpush2.bf16.msra.mxu0 0
      %2181 = vmatprep.mubr.bf16.mxu0 0
      %2182 = vmatmul.mubr.bf16.gmra.mxu0 %v2102
      %v2183 = vpop.f32.mrf.mxu0
      %v2184 = vadd.f32 %v2100, %v2183
      %v2185 = vpop.f32.mrf.mxu0
      %v2186 = vpop.f32.mrf.mxu0
      %v2187 = vadd.f32 %v2100, %v2186
      %v2188 = vpop.f32.mrf.mxu0
      %2189 = vmatprep.mubr.bf16.mxu0 0
      %2190 = vmatmul.mubr.bf16.gmra.mxu0 %v2105
      %v2191 = vpop.f32.mrf.mxu0
      %v2192 = vadd.f32 %v2100, %v2191
      %v2193 = vpop.f32.mrf.mxu0
      %v2194 = vpop.f32.mrf.mxu0
      %v2195 = vadd.f32 %v2100, %v2194
      %v2196 = vpop.f32.mrf.mxu0
      %2197 = vmatprep.mubr.bf16.mxu0 0
      %2198 = vmatmul.mubr.bf16.gmra.mxu0 %v2108
      %v2199 = vpop.f32.mrf.mxu0
      %v2200 = vadd.f32 %v2100, %v2199
      %v2201 = vpop.f32.mrf.mxu0
      %v2202 = vpop.f32.mrf.mxu0
      %v2203 = vadd.f32 %v2100, %v2202
      %v2204 = vpop.f32.mrf.mxu0
      %2205 = vmatprep.mubr.bf16.mxu0 0
      %2206 = vmatmul.mubr.bf16.gmra.mxu0 %v2111
      %v2207 = vpop.f32.mrf.mxu0
      %v2208 = vadd.f32 %v2100, %v2207
      %v2209 = vpop.f32.mrf.mxu0
      %v2210 = vpop.f32.mrf.mxu0
      %v2211 = vadd.f32 %v2100, %v2210
      %v2212 = vpop.f32.mrf.mxu0
      %2213 = vmatprep.mubr.bf16.mxu0 0
      %2214 = vmatmul.mubr.bf16.gmra.mxu0 %v2114
      %v2215 = vpop.f32.mrf.mxu0
      %v2216 = vadd.f32 %v2100, %v2215
      %v2217 = vpop.f32.mrf.mxu0
      %v2218 = vpop.f32.mrf.mxu0
      %v2219 = vadd.f32 %v2100, %v2218
      %v2220 = vpop.f32.mrf.mxu0
      %2221 = vmatprep.mubr.bf16.mxu0 0
      %2222 = vmatmul.mubr.bf16.gmra.mxu0 %v2117
      %v2223 = vpop.f32.mrf.mxu0
      %v2224 = vadd.f32 %v2100, %v2223
      %v2225 = vpop.f32.mrf.mxu0
      %v2226 = vpop.f32.mrf.mxu0
      %v2227 = vadd.f32 %v2100, %v2226
      %v2228 = vpop.f32.mrf.mxu0
      %2229 = vmatprep.mubr.bf16.mxu0 0
      %2230 = vmatmul.mubr.bf16.gmra.mxu0 %v2120
      %v2231 = vpop.f32.mrf.mxu0
      %v2232 = vadd.f32 %v2100, %v2231
      %v2233 = vpop.f32.mrf.mxu0
      %v2234 = vpop.f32.mrf.mxu0
      %v2235 = vadd.f32 %v2100, %v2234
      %v2236 = vpop.f32.mrf.mxu0
      %2237 = vmatprep.mubr.bf16.mxu0 0
      %2238 = vmatmul.mubr.bf16.gmra.mxu0 %v2123
      %v2239 = vpop.f32.mrf.mxu0
      %v2240 = vadd.f32 %v2100, %v2239
      %v2241 = vpop.f32.mrf.mxu0
      %v2242 = vpop.f32.mrf.mxu0
      %v2243 = vadd.f32 %v2100, %v2242
      %v2244 = vpop.f32.mrf.mxu0
      %2245 = vmatprep.mubr.bf16.mxu0 0
      %2246 = vmatmul.mubr.bf16.gmra.mxu0 %v2126
      %v2247 = vpop.f32.mrf.mxu0
      %v2248 = vadd.f32 %v2100, %v2247
      %v2249 = vpop.f32.mrf.mxu0
      %v2250 = vpop.f32.mrf.mxu0
      %v2251 = vadd.f32 %v2100, %v2250
      %v2252 = vpop.f32.mrf.mxu0
      %2253 = vmatprep.mubr.bf16.mxu0 0
      %2254 = vmatmul.mubr.bf16.gmra.mxu0 %v2129
      %v2255 = vpop.f32.mrf.mxu0
      %v2256 = vadd.f32 %v2100, %v2255
      %v2257 = vpop.f32.mrf.mxu0
      %v2258 = vpop.f32.mrf.mxu0
      %v2259 = vadd.f32 %v2100, %v2258
      %v2260 = vpop.f32.mrf.mxu0
      %2261 = vmatprep.mubr.bf16.mxu0 0
      %2262 = vmatmul.mubr.bf16.gmra.mxu0 %v2132
      %v2263 = vpop.f32.mrf.mxu0
      %v2264 = vadd.f32 %v2100, %v2263
      %v2265 = vpop.f32.mrf.mxu0
      %v2266 = vpop.f32.mrf.mxu0
      %v2267 = vadd.f32 %v2100, %v2266
      %v2268 = vpop.f32.mrf.mxu0
      %2269 = vmatprep.mubr.bf16.mxu0 0
      %2270 = vmatmul.mubr.bf16.gmra.mxu0 %v2135
      %v2271 = vpop.f32.mrf.mxu0
      %v2272 = vadd.f32 %v2100, %v2271
      %v2273 = vpop.f32.mrf.mxu0
      %v2274 = vpop.f32.mrf.mxu0
      %v2275 = vadd.f32 %v2100, %v2274
      %v2276 = vpop.f32.mrf.mxu0
      %2277 = vmatprep.mubr.bf16.mxu0 0
      %2278 = vmatmul.mubr.bf16.gmra.mxu0 %v2138
      %v2279 = vpop.f32.mrf.mxu0
      %v2280 = vadd.f32 %v2100, %v2279
      %v2281 = vpop.f32.mrf.mxu0
      %v2282 = vpop.f32.mrf.mxu0
      %v2283 = vadd.f32 %v2100, %v2282
      %v2284 = vpop.f32.mrf.mxu0
      %2285 = vmatprep.mubr.bf16.mxu0 0
      %2286 = vmatmul.mubr.bf16.gmra.mxu0 %v2141
      %v2287 = vpop.f32.mrf.mxu0
      %v2288 = vadd.f32 %v2100, %v2287
      %v2289 = vpop.f32.mrf.mxu0
      %v2290 = vpop.f32.mrf.mxu0
      %v2291 = vadd.f32 %v2100, %v2290
      %v2292 = vpop.f32.mrf.mxu0
      %2293 = vmatprep.mubr.bf16.mxu0 0
      %2294 = vmatmul.mubr.bf16.gmra.mxu0 %v2144
      %v2295 = vpop.f32.mrf.mxu0
      %v2296 = vadd.f32 %v2100, %v2295
      %v2297 = vpop.f32.mrf.mxu0
      %v2298 = vpop.f32.mrf.mxu0
      %v2299 = vadd.f32 %v2100, %v2298
      %v2300 = vpop.f32.mrf.mxu0
      %2301 = vmatprep.mubr.bf16.mxu0 0
      %2302 = vmatmul.mubr.bf16.gmra.mxu0 %v2147
      %v2303 = vpop.f32.mrf.mxu0
      %v2304 = vadd.f32 %v2100, %v2303
      %v2305 = vpop.f32.mrf.mxu0
      %v2306 = vpop.f32.mrf.mxu0
      %v2307 = vadd.f32 %v2100, %v2306
      %v2308 = vpop.f32.mrf.mxu0
      %2309 = vdwg.mxu0
      %2342 = vrot.lane.b32.xlu0 %v2184, 8
      %v2343 = vpop.permute.xlu0 %2342
      %2344 = vrot.lane.b32.xlu0 %v2187, 8
      %v2345 = vpop.permute.xlu0 %2344
      %2346 = vrot.lane.b32.xlu0 %v2192, 8
      %v2347 = vpop.permute.xlu0 %2346
      %2348 = vrot.lane.b32.xlu0 %v2195, 8
      %v2349 = vpop.permute.xlu0 %2348
      %2350 = vrot.lane.b32.xlu0 %v2200, 8
      %v2351 = vpop.permute.xlu0 %2350
      %2352 = vrot.lane.b32.xlu0 %v2203, 8
      %v2353 = vpop.permute.xlu0 %2352
      %2354 = vrot.lane.b32.xlu0 %v2208, 8
      %v2355 = vpop.permute.xlu0 %2354
      %2356 = vrot.lane.b32.xlu0 %v2211, 8
      %v2357 = vpop.permute.xlu0 %2356
      %2358 = vrot.lane.b32.xlu0 %v2216, 8
      %v2359 = vpop.permute.xlu0 %2358
      %2360 = vrot.lane.b32.xlu0 %v2219, 8
      %v2361 = vpop.permute.xlu0 %2360
      %2362 = vrot.lane.b32.xlu0 %v2224, 8
      %v2363 = vpop.permute.xlu0 %2362
      %2364 = vrot.lane.b32.xlu0 %v2227, 8
      %v2365 = vpop.permute.xlu0 %2364
      %2366 = vrot.lane.b32.xlu0 %v2232, 8
      %v2367 = vpop.permute.xlu0 %2366
      %2368 = vrot.lane.b32.xlu0 %v2235, 8
      %v2369 = vpop.permute.xlu0 %2368
      %2370 = vrot.lane.b32.xlu0 %v2240, 8
      %v2371 = vpop.permute.xlu0 %2370
      %2372 = vrot.lane.b32.xlu0 %v2243, 8
      %v2373 = vpop.permute.xlu0 %2372
      %2374 = vrot.lane.b32.xlu0 %v2248, 8
      %v2375 = vpop.permute.xlu0 %2374
      %2376 = vrot.lane.b32.xlu0 %v2251, 8
      %v2377 = vpop.permute.xlu0 %2376
      %2378 = vrot.lane.b32.xlu0 %v2256, 8
      %v2379 = vpop.permute.xlu0 %2378
      %2380 = vrot.lane.b32.xlu0 %v2259, 8
      %v2381 = vpop.permute.xlu0 %2380
      %2382 = vrot.lane.b32.xlu0 %v2264, 8
      %v2383 = vpop.permute.xlu0 %2382
      %2384 = vrot.lane.b32.xlu0 %v2267, 8
      %v2385 = vpop.permute.xlu0 %2384
      %2386 = vrot.lane.b32.xlu0 %v2272, 8
      %v2387 = vpop.permute.xlu0 %2386
      %2388 = vrot.lane.b32.xlu0 %v2275, 8
      %v2389 = vpop.permute.xlu0 %2388
      %2390 = vrot.lane.b32.xlu0 %v2280, 8
      %v2391 = vpop.permute.xlu0 %2390
      %2392 = vrot.lane.b32.xlu0 %v2283, 8
      %v2393 = vpop.permute.xlu0 %2392
      %2394 = vrot.lane.b32.xlu0 %v2288, 8
      %v2395 = vpop.permute.xlu0 %2394
      %2396 = vrot.lane.b32.xlu0 %v2291, 8
      %v2397 = vpop.permute.xlu0 %2396
      %2398 = vrot.lane.b32.xlu0 %v2296, 8
      %v2399 = vpop.permute.xlu0 %2398
      %2400 = vrot.lane.b32.xlu0 %v2299, 8
      %v2401 = vpop.permute.xlu0 %2400
      %2402 = vrot.lane.b32.xlu0 %v2304, 8
      %v2403 = vpop.permute.xlu0 %2402
      %2404 = vrot.lane.b32.xlu0 %v2307, 8
      %v2405 = vpop.permute.xlu0 %2404
      %2470 = vrot.lane.b32.xlu0 %v1456, 20
      %v2471 = vpop.permute.xlu0 %2470
      %2472 = vrot.lane.b32.xlu0 %v1457, 20
      %v2473 = vpop.permute.xlu0 %2472
      %2474 = vrot.lane.b32.xlu0 %v1458, 20
      %v2475 = vpop.permute.xlu0 %2474
      %2476 = vrot.lane.b32.xlu0 %v1459, 20
      %v2477 = vpop.permute.xlu0 %2476
      %2478 = vrot.lane.b32.xlu0 %v1460, 20
      %v2479 = vpop.permute.xlu0 %2478
      %2480 = vrot.lane.b32.xlu0 %v1461, 20
      %v2481 = vpop.permute.xlu0 %2480
      %2482 = vrot.lane.b32.xlu0 %v1462, 20
      %v2483 = vpop.permute.xlu0 %2482
      %2484 = vrot.lane.b32.xlu0 %v1463, 20
      %v2485 = vpop.permute.xlu0 %2484
      %2486 = vrot.lane.b32.xlu0 %v1464, 20
      %v2487 = vpop.permute.xlu0 %2486
      %2488 = vrot.lane.b32.xlu0 %v1465, 20
      %v2489 = vpop.permute.xlu0 %2488
      %2490 = vrot.lane.b32.xlu0 %v1466, 20
      %v2491 = vpop.permute.xlu0 %2490
      %2492 = vrot.lane.b32.xlu0 %v1467, 20
      %v2493 = vpop.permute.xlu0 %2492
      %2494 = vrot.lane.b32.xlu0 %v1468, 20
      %v2495 = vpop.permute.xlu0 %2494
      %2496 = vrot.lane.b32.xlu0 %v1469, 20
      %v2497 = vpop.permute.xlu0 %2496
      %2498 = vrot.lane.b32.xlu0 %v1470, 20
      %v2499 = vpop.permute.xlu0 %2498
      %2500 = vrot.lane.b32.xlu0 %v1471, 20
      %v2501 = vpop.permute.xlu0 %2500
      %2502 = vrot.lane.b32.xlu0 %v1472, 20
      %v2503 = vpop.permute.xlu0 %2502
      %2504 = vrot.lane.b32.xlu0 %v1473, 20
      %v2505 = vpop.permute.xlu0 %2504
      %2506 = vrot.lane.b32.xlu0 %v1474, 20
      %v2507 = vpop.permute.xlu0 %2506
      %2508 = vrot.lane.b32.xlu0 %v1475, 20
      %v2509 = vpop.permute.xlu0 %2508
      %2510 = vrot.lane.b32.xlu0 %v1476, 20
      %v2511 = vpop.permute.xlu0 %2510
      %2512 = vrot.lane.b32.xlu0 %v1477, 20
      %v2513 = vpop.permute.xlu0 %2512
      %2514 = vrot.lane.b32.xlu0 %v1478, 20
      %v2515 = vpop.permute.xlu0 %2514
      %2516 = vrot.lane.b32.xlu0 %v1479, 20
      %v2517 = vpop.permute.xlu0 %2516
      %2518 = vrot.lane.b32.xlu0 %v1480, 20
      %v2519 = vpop.permute.xlu0 %2518
      %2520 = vrot.lane.b32.xlu0 %v1481, 20
      %v2521 = vpop.permute.xlu0 %2520
      %2522 = vrot.lane.b32.xlu0 %v1482, 20
      %v2523 = vpop.permute.xlu0 %2522
      %2524 = vrot.lane.b32.xlu0 %v1483, 20
      %v2525 = vpop.permute.xlu0 %2524
      %2526 = vrot.lane.b32.xlu0 %v1484, 20
      %v2527 = vpop.permute.xlu0 %2526
      %2528 = vrot.lane.b32.xlu0 %v1485, 20
      %v2529 = vpop.permute.xlu0 %2528
      %2530 = vrot.lane.b32.xlu0 %v1486, 20
      %v2531 = vpop.permute.xlu0 %2530
      %2532 = vrot.lane.b32.xlu0 %v1487, 20
      %v2533 = vpop.permute.xlu0 %2532
      %2598 = vrot.lane.b32.xlu0 %v702, 92
      %v2599 = vpop.permute.xlu0 %2598
      %2600 = vrot.lane.b32.xlu0 %v704, 92
      %v2601 = vpop.permute.xlu0 %2600
      %2602 = vrot.lane.b32.xlu0 %v706, 92
      %v2603 = vpop.permute.xlu0 %2602
      %2604 = vrot.lane.b32.xlu0 %v708, 92
      %v2605 = vpop.permute.xlu0 %2604
      %2606 = vrot.lane.b32.xlu0 %v710, 92
      %v2607 = vpop.permute.xlu0 %2606
      %2608 = vrot.lane.b32.xlu0 %v712, 92
      %v2609 = vpop.permute.xlu0 %2608
      %2610 = vrot.lane.b32.xlu0 %v714, 92
      %v2611 = vpop.permute.xlu0 %2610
      %2612 = vrot.lane.b32.xlu0 %v716, 92
      %v2613 = vpop.permute.xlu0 %2612
      %2614 = vrot.lane.b32.xlu0 %v718, 92
      %v2615 = vpop.permute.xlu0 %2614
      %2616 = vrot.lane.b32.xlu0 %v720, 92
      %v2617 = vpop.permute.xlu0 %2616
      %2618 = vrot.lane.b32.xlu0 %v722, 92
      %v2619 = vpop.permute.xlu0 %2618
      %2620 = vrot.lane.b32.xlu0 %v724, 92
      %v2621 = vpop.permute.xlu0 %2620
      %2622 = vrot.lane.b32.xlu0 %v726, 92
      %v2623 = vpop.permute.xlu0 %2622
      %2624 = vrot.lane.b32.xlu0 %v728, 92
      %v2625 = vpop.permute.xlu0 %2624
      %2626 = vrot.lane.b32.xlu0 %v730, 92
      %v2627 = vpop.permute.xlu0 %2626
      %2628 = vrot.lane.b32.xlu0 %v732, 92
      %v2629 = vpop.permute.xlu0 %2628
      %2630 = vrot.lane.b32.xlu0 %v734, 92
      %v2631 = vpop.permute.xlu0 %2630
      %2632 = vrot.lane.b32.xlu0 %v736, 92
      %v2633 = vpop.permute.xlu0 %2632
      %2634 = vrot.lane.b32.xlu0 %v738, 92
      %v2635 = vpop.permute.xlu0 %2634
      %2636 = vrot.lane.b32.xlu0 %v740, 92
      %v2637 = vpop.permute.xlu0 %2636
      %2638 = vrot.lane.b32.xlu0 %v742, 92
      %v2639 = vpop.permute.xlu0 %2638
      %2640 = vrot.lane.b32.xlu0 %v744, 92
      %v2641 = vpop.permute.xlu0 %2640
      %2642 = vrot.lane.b32.xlu0 %v746, 92
      %v2643 = vpop.permute.xlu0 %2642
      %2644 = vrot.lane.b32.xlu0 %v748, 92
      %v2645 = vpop.permute.xlu0 %2644
      %2646 = vrot.lane.b32.xlu0 %v750, 92
      %v2647 = vpop.permute.xlu0 %2646
      %2648 = vrot.lane.b32.xlu0 %v752, 92
      %v2649 = vpop.permute.xlu0 %2648
      %2650 = vrot.lane.b32.xlu0 %v754, 92
      %v2651 = vpop.permute.xlu0 %2650
      %2652 = vrot.lane.b32.xlu0 %v756, 92
      %v2653 = vpop.permute.xlu0 %2652
      %2654 = vrot.lane.b32.xlu0 %v758, 92
      %v2655 = vpop.permute.xlu0 %2654
      %2656 = vrot.lane.b32.xlu0 %v760, 92
      %v2657 = vpop.permute.xlu0 %2656
      %2658 = vrot.lane.b32.xlu0 %v762, 92
      %v2659 = vpop.permute.xlu0 %2658
      %2660 = vrot.lane.b32.xlu0 %v764, 92
      %v2661 = vpop.permute.xlu0 %2660
      %v2694 = vsel %vm1559, %v914, %v1136
      %v2695 = vsel %vm1559, %v917, %v1137
      %v2696 = vsel %vm1559, %v922, %v1138
      %v2697 = vsel %vm1559, %v925, %v1139
      %v2698 = vsel %vm1559, %v930, %v1140
      %v2699 = vsel %vm1559, %v933, %v1141
      %v2700 = vsel %vm1559, %v938, %v1142
      %v2701 = vsel %vm1559, %v941, %v1143
      %v2702 = vsel %vm1559, %v946, %v1144
      %v2703 = vsel %vm1559, %v949, %v1145
      %v2704 = vsel %vm1559, %v954, %v1146
      %v2705 = vsel %vm1559, %v957, %v1147
      %v2706 = vsel %vm1559, %v962, %v1148
      %v2707 = vsel %vm1559, %v965, %v1149
      %v2708 = vsel %vm1559, %v970, %v1150
      %v2709 = vsel %vm1559, %v973, %v1151
      %v2710 = vsel %vm1559, %v978, %v1152
      %v2711 = vsel %vm1559, %v981, %v1153
      %v2712 = vsel %vm1559, %v986, %v1154
      %v2713 = vsel %vm1559, %v989, %v1155
      %v2714 = vsel %vm1559, %v994, %v1156
      %v2715 = vsel %vm1559, %v997, %v1157
      %v2716 = vsel %vm1559, %v1002, %v1158
      %v2717 = vsel %vm1559, %v1005, %v1159
      %v2718 = vsel %vm1559, %v1010, %v1160
      %v2719 = vsel %vm1559, %v1013, %v1161
      %v2720 = vsel %vm1559, %v1018, %v1162
      %v2721 = vsel %vm1559, %v1021, %v1163
      %v2722 = vsel %vm1559, %v1026, %v1164
      %v2723 = vsel %vm1559, %v1029, %v1165
      %v2724 = vsel %vm1559, %v1034, %v1166
      %v2725 = vsel %vm1559, %v1037, %v1167
      %vm2726 = vcmask 64512
      %v2727 = vsel %vm2726, %v2694, %v2343
      %v2728 = vsel %vm2726, %v2695, %v2345
      %v2729 = vsel %vm2726, %v2696, %v2347
      %v2730 = vsel %vm2726, %v2697, %v2349
      %v2731 = vsel %vm2726, %v2698, %v2351
      %v2732 = vsel %vm2726, %v2699, %v2353
      %v2733 = vsel %vm2726, %v2700, %v2355
      %v2734 = vsel %vm2726, %v2701, %v2357
      %v2735 = vsel %vm2726, %v2702, %v2359
      %v2736 = vsel %vm2726, %v2703, %v2361
      %v2737 = vsel %vm2726, %v2704, %v2363
      %v2738 = vsel %vm2726, %v2705, %v2365
      %v2739 = vsel %vm2726, %v2706, %v2367
      %v2740 = vsel %vm2726, %v2707, %v2369
      %v2741 = vsel %vm2726, %v2708, %v2371
      %v2742 = vsel %vm2726, %v2709, %v2373
      %v2743 = vsel %vm2726, %v2710, %v2375
      %v2744 = vsel %vm2726, %v2711, %v2377
      %v2745 = vsel %vm2726, %v2712, %v2379
      %v2746 = vsel %vm2726, %v2713, %v2381
      %v2747 = vsel %vm2726, %v2714, %v2383
      %v2748 = vsel %vm2726, %v2715, %v2385
      %v2749 = vsel %vm2726, %v2716, %v2387
      %v2750 = vsel %vm2726, %v2717, %v2389
      %v2751 = vsel %vm2726, %v2718, %v2391
      %v2752 = vsel %vm2726, %v2719, %v2393
      %v2753 = vsel %vm2726, %v2720, %v2395
      %v2754 = vsel %vm2726, %v2721, %v2397
      %v2755 = vsel %vm2726, %v2722, %v2399
      %v2756 = vsel %vm2726, %v2723, %v2401
      %v2757 = vsel %vm2726, %v2724, %v2403
      %v2758 = vsel %vm2726, %v2725, %v2405
      %v2759 = vsel %vm206, %v2727, %v2471
      %v2760 = vsel %vm206, %v2728, %v2473
      %v2761 = vsel %vm206, %v2729, %v2475
      %v2762 = vsel %vm206, %v2730, %v2477
      %v2763 = vsel %vm206, %v2731, %v2479
      %v2764 = vsel %vm206, %v2732, %v2481
      %v2765 = vsel %vm206, %v2733, %v2483
      %v2766 = vsel %vm206, %v2734, %v2485
      %v2767 = vsel %vm206, %v2735, %v2487
      %v2768 = vsel %vm206, %v2736, %v2489
      %v2769 = vsel %vm206, %v2737, %v2491
      %v2770 = vsel %vm206, %v2738, %v2493
      %v2771 = vsel %vm206, %v2739, %v2495
      %v2772 = vsel %vm206, %v2740, %v2497
      %v2773 = vsel %vm206, %v2741, %v2499
      %v2774 = vsel %vm206, %v2742, %v2501
      %v2775 = vsel %vm206, %v2743, %v2503
      %v2776 = vsel %vm206, %v2744, %v2505
      %v2777 = vsel %vm206, %v2745, %v2507
      %v2778 = vsel %vm206, %v2746, %v2509
      %v2779 = vsel %vm206, %v2747, %v2511
      %v2780 = vsel %vm206, %v2748, %v2513
      %v2781 = vsel %vm206, %v2749, %v2515
      %v2782 = vsel %vm206, %v2750, %v2517
      %v2783 = vsel %vm206, %v2751, %v2519
      %v2784 = vsel %vm206, %v2752, %v2521
      %v2785 = vsel %vm206, %v2753, %v2523
      %v2786 = vsel %vm206, %v2754, %v2525
      %v2787 = vsel %vm206, %v2755, %v2527
      %v2788 = vsel %vm206, %v2756, %v2529
      %v2789 = vsel %vm206, %v2757, %v2531
      %v2790 = vsel %vm206, %v2758, %v2533
      %vm2791 = vcmask 228352
      %v2792 = vsel %vm2791, %v2759, %v2599
      %v2793 = vsel %vm2791, %v2760, %v2601
      %v2794 = vsel %vm2791, %v2761, %v2603
      %v2795 = vsel %vm2791, %v2762, %v2605
      %v2796 = vsel %vm2791, %v2763, %v2607
      %v2797 = vsel %vm2791, %v2764, %v2609
      %v2798 = vsel %vm2791, %v2765, %v2611
      %v2799 = vsel %vm2791, %v2766, %v2613
      %v2800 = vsel %vm2791, %v2767, %v2615
      %v2801 = vsel %vm2791, %v2768, %v2617
      %v2802 = vsel %vm2791, %v2769, %v2619
      %v2803 = vsel %vm2791, %v2770, %v2621
      %v2804 = vsel %vm2791, %v2771, %v2623
      %v2805 = vsel %vm2791, %v2772, %v2625
      %v2806 = vsel %vm2791, %v2773, %v2627
      %v2807 = vsel %vm2791, %v2774, %v2629
      %v2808 = vsel %vm2791, %v2775, %v2631
      %v2809 = vsel %vm2791, %v2776, %v2633
      %v2810 = vsel %vm2791, %v2777, %v2635
      %v2811 = vsel %vm2791, %v2778, %v2637
      %v2812 = vsel %vm2791, %v2779, %v2639
      %v2813 = vsel %vm2791, %v2780, %v2641
      %v2814 = vsel %vm2791, %v2781, %v2643
      %v2815 = vsel %vm2791, %v2782, %v2645
      %v2816 = vsel %vm2791, %v2783, %v2647
      %v2817 = vsel %vm2791, %v2784, %v2649
      %v2818 = vsel %vm2791, %v2785, %v2651
      %v2819 = vsel %vm2791, %v2786, %v2653
      %v2820 = vsel %vm2791, %v2787, %v2655
      %v2821 = vsel %vm2791, %v2788, %v2657
      %v2822 = vsel %vm2791, %v2789, %v2659
      %v2823 = vsel %vm2791, %v2790, %v2661
      %v2824 = vsel %vm1832, %v2792, 0.0
      %v2825 = vsel %vm1832, %v2793, 0.0
      %v2826 = vsel %vm1832, %v2794, 0.0
      %v2827 = vsel %vm1832, %v2795, 0.0
      %v2828 = vsel %vm1832, %v2796, 0.0
      %v2829 = vsel %vm1832, %v2797, 0.0
      %v2830 = vsel %vm1832, %v2798, 0.0
      %v2831 = vsel %vm1832, %v2799, 0.0
      %v2832 = vsel %vm1832, %v2800, 0.0
      %v2833 = vsel %vm1832, %v2801, 0.0
      %v2834 = vsel %vm1832, %v2802, 0.0
      %v2835 = vsel %vm1832, %v2803, 0.0
      %v2836 = vsel %vm1832, %v2804, 0.0
      %v2837 = vsel %vm1832, %v2805, 0.0
      %v2838 = vsel %vm1832, %v2806, 0.0
      %v2839 = vsel %vm1832, %v2807, 0.0
      %v2840 = vsel %vm1832, %v2808, 0.0
      %v2841 = vsel %vm1832, %v2809, 0.0
      %v2842 = vsel %vm1832, %v2810, 0.0
      %v2843 = vsel %vm1832, %v2811, 0.0
      %v2844 = vsel %vm1832, %v2812, 0.0
      %v2845 = vsel %vm1832, %v2813, 0.0
      %v2846 = vsel %vm1832, %v2814, 0.0
      %v2847 = vsel %vm1832, %v2815, 0.0
      %v2848 = vsel %vm1832, %v2816, 0.0
      %v2849 = vsel %vm1832, %v2817, 0.0
      %v2850 = vsel %vm1832, %v2818, 0.0
      %v2851 = vsel %vm1832, %v2819, 0.0
      %v2852 = vsel %vm1832, %v2820, 0.0
      %v2853 = vsel %vm1832, %v2821, 0.0
      %v2854 = vsel %vm1832, %v2822, 0.0
      %v2855 = vsel %vm1832, %v2823, 0.0
      %2856 = vst [vmem:[%s145] sm:$0xff] %v2824
      %2857 = vst [vmem:[%s145 + $0x8] sm:$0xff] %v2825
      %2858 = vst [vmem:[%s145 + $0x10] sm:$0xff] %v2826
      %2859 = vst [vmem:[%s145 + $0x18] sm:$0xff] %v2827
      %2860 = vst [vmem:[%s145 + $0x20] sm:$0xff] %v2828
      %2861 = vst [vmem:[%s145 + $0x28] sm:$0xff] %v2829
      %2862 = vst [vmem:[%s145 + $0x30] sm:$0xff] %v2830
      %2863 = vst [vmem:[%s145 + $0x38] sm:$0xff] %v2831
      %2864 = vst [vmem:[%s145 + $0x40] sm:$0xff] %v2832
      %2865 = vst [vmem:[%s145 + $0x48] sm:$0xff] %v2833
      %2866 = vst [vmem:[%s145 + $0x50] sm:$0xff] %v2834
      %2867 = vst [vmem:[%s145 + $0x58] sm:$0xff] %v2835
      %2868 = vst [vmem:[%s145 + $0x60] sm:$0xff] %v2836
      %2869 = vst [vmem:[%s145 + $0x68] sm:$0xff] %v2837
      %2870 = vst [vmem:[%s145 + $0x70] sm:$0xff] %v2838
      %2871 = vst [vmem:[%s145 + $0x78] sm:$0xff] %v2839
      %2872 = vst [vmem:[%s145 + $0x80] sm:$0xff] %v2840
      %2873 = vst [vmem:[%s145 + $0x88] sm:$0xff] %v2841
      %2874 = vst [vmem:[%s145 + $0x90] sm:$0xff] %v2842
      %2875 = vst [vmem:[%s145 + $0x98] sm:$0xff] %v2843
      %2876 = vst [vmem:[%s145 + $0xa0] sm:$0xff] %v2844
      %2877 = vst [vmem:[%s145 + $0xa8] sm:$0xff] %v2845
      %2878 = vst [vmem:[%s145 + $0xb0] sm:$0xff] %v2846
      %2879 = vst [vmem:[%s145 + $0xb8] sm:$0xff] %v2847
      %2880 = vst [vmem:[%s145 + $0xc0] sm:$0xff] %v2848
      %2881 = vst [vmem:[%s145 + $0xc8] sm:$0xff] %v2849
      %2882 = vst [vmem:[%s145 + $0xd0] sm:$0xff] %v2850
      %2883 = vst [vmem:[%s145 + $0xd8] sm:$0xff] %v2851
      %2884 = vst [vmem:[%s145 + $0xe0] sm:$0xff] %v2852
      %2885 = vst [vmem:[%s145 + $0xe8] sm:$0xff] %v2853
      %2886 = vst [vmem:[%s145 + $0xf0] sm:$0xff] %v2854
      %2887 = vst [vmem:[%s145 + $0xf8] sm:$0xff] %v2855
      %s2888 = smul.u32 32, %s13
      %p2889 = scmp.lt.s32.totalorder %s2888, 63
      %s2890 = scalar_select %p2889, %s2888, 63
      %s2891 = smul.addr %s2890, 8
      %s2892 = scalar_lea.vmem %s2, %s2891
      // Predicated region
      $region29: #{_lambda_.1} parent=27 // pred_check
        %p2893 = pneg %p78
      $region30: #{_lambda_.1} parent=27 // pred_check_branch
        %2895 = sbr.rel (%p2893) target = $region32
      $region31: #{_lambda_.1} parent=27 // pred_region
        %s2896 = smul.u32 32, %s13
      $region32: #{_lambda_.1} parent=27 // pred_fallthru
        _
    $region28: #{_lambda_.1} parent=5 // pred_fallthru
      _
    %p2897 = scmp.le.s32.totalorder 2, %s8
    // Predicated region
    $region33: #{_lambda_.1} parent=5 // pred_check
      %p2898 = pneg %p2897
    $region34: #{_lambda_.1} parent=5 // pred_check_branch
      %2900 = sbr.rel (%p2898) target = $region36
    $region35: #{_lambda_.1} parent=5 // pred_region
      %s2901 = ssub.s32 %s8, 2
      // Predicated region
      $region37: #{_lambda_.1} parent=35 // pred_check
        %p2902 = pneg %p84
      $region38: #{_lambda_.1} parent=35 // pred_check_branch
        %2904 = sbr.rel (%p2902) target = $region40
      $region39: #{_lambda_.1} parent=35 // pred_region
        %s2905 = smul.u32 32, %s14
        %p2906 = scmp.lt.s32.totalorder %s2905, 63
        %s2907 = scalar_select %p2906, %s2905, 63
        %s2908 = smul.addr %s2907, 8
        %s2909 = scalar_lea.vmem %s2, %s2908
      $region40: #{_lambda_.1} parent=35 // pred_fallthru
        _
    $region36: #{_lambda_.1} parent=5 // pred_fallthru
      _
  $region6: #{_lambda_.1} parent=0 // loop_footer
    %s12 = sadd.s32 1, %s8
  $region7: #{_lambda_.1} parent=0 // loop_footer_branch
    %7 = sbr.rel target = $region3
  $region8: #{_lambda_.1} parent=0 // loop_exit
    _

</llo_original>
